<compile_context>
chip_gen: v5e
topology: v5e:2x2
jax: 0.10.0
libtpu: 0.0.40
codegen_flags: <defaults>
</compile_context>

<pallas_src>
import functools

import jax
import jax.numpy as jnp
from jax.experimental import pallas as pl
from jax.experimental.pallas import tpu as pltpu

D_IN, H1, H2, D_OUT = 784, 128, 256, 10
D_IN_PAD = 896    # 7 * 128 lanes (zero-padded K for the first GEMM)
D_OUT_PAD = 128   # lane-dense output (real logits are the first 10 columns)


def mlp_kernel(x_ref, w1_ref, b1_ref, w2_ref, b2_ref, w3_ref, b3_ref, o_ref):
    # hidden1 + ReLU  (bf16 operands, f32 accumulation on the MXU)
    h1 = jnp.dot(x_ref[...], w1_ref[...], preferred_element_type=jnp.float32)
    h1 = jnp.maximum(h1 + b1_ref[...], 0.0).astype(jnp.bfloat16)
    # hidden2 + ReLU
    h2 = jnp.dot(h1, w2_ref[...], preferred_element_type=jnp.float32)
    h2 = jnp.maximum(h2 + b2_ref[...], 0.0).astype(jnp.bfloat16)
    # out (lane-padded to 128, no activation)
    o = jnp.dot(h2, w3_ref[...], preferred_element_type=jnp.float32)
    o_ref[...] = (o + b3_ref[...]).astype(o_ref.dtype)


def mnist_nn_forward(x, w1, b1, w2, b2, w3, b3, *, tm=128):
    """x: (B, 784) f32; weights stored (in_features, out_features). Returns (B, 10) f32."""
    B = x.shape[0]
    b_pad = pl.cdiv(B, tm) * tm

    # --- pad + cast in plain JAX (layout plumbing, outside the kernel) ---
    x_p = jnp.zeros((b_pad, D_IN_PAD), jnp.bfloat16).at[:B, :D_IN].set(x.astype(jnp.bfloat16))
    w1_p = jnp.zeros((D_IN_PAD, H1), jnp.bfloat16).at[:D_IN, :].set(w1.astype(jnp.bfloat16))
    w2_c = w2.astype(jnp.bfloat16)
    w3_p = jnp.zeros((H2, D_OUT_PAD), jnp.bfloat16).at[:, :D_OUT].set(w3.astype(jnp.bfloat16))
    b1_c = b1.astype(jnp.float32)
    b2_c = b2.astype(jnp.float32)
    b3_p = jnp.zeros((1, D_OUT_PAD), jnp.float32).at[:, :D_OUT].set(b3.astype(jnp.float32))

    grid = (b_pad // tm,)
    resident = lambda shape: pl.BlockSpec(shape, lambda i: (0, 0))  # weights stay in VMEM

    flops = 2 * b_pad * (D_IN_PAD * H1 + H1 * H2 + H2 * D_OUT_PAD)
    bytes_accessed = (
        x_p.size * 2 + w1_p.size * 2 + w2_c.size * 2 + w3_p.size * 2
        + b1_c.size * 4 + b2_c.size * 4 + b3_p.size * 4
        + b_pad * D_OUT_PAD * 4)

    out_padded = pl.pallas_call(
        mlp_kernel,
        out_shape=jax.ShapeDtypeStruct((b_pad, D_OUT_PAD), jnp.float32),
        grid=grid,
        in_specs=[
            pl.BlockSpec((tm, D_IN_PAD), lambda i: (i, 0)),   # x tile: pipelined over batch
            resident((D_IN_PAD, H1)), resident((1, H1)),
            resident((H1, H2)),       resident((1, H2)),
            resident((H2, D_OUT_PAD)), resident((1, D_OUT_PAD)),
        ],
        out_specs=pl.BlockSpec((tm, D_OUT_PAD), lambda i: (i, 0)),
        compiler_params=pltpu.CompilerParams(
            dimension_semantics=("parallel",),        # megacore sharding on v7x
            vmem_limit_bytes=32 * 1024 * 1024,
        ),
        cost_estimate=pl.CostEstimate(
            flops=flops, transcendentals=0, bytes_accessed=bytes_accessed),
    )(x_p, w1_p, b1_c, w2_c, b2_c, w3_p, b3_p)

    return out_padded[:B, :D_OUT]


def init_params(key):
    """Deterministic init mimicking PyTorch Linear default (U[-1/sqrt(in), 1/sqrt(in)])."""
    def linear(k, fan_in, fan_out):
        kw, kb = jax.random.split(k)
        bound = 1.0 / jnp.sqrt(fan_in)
        w = jax.random.uniform(kw, (fan_in, fan_out), jnp.float32, -bound, bound)
        b = jax.random.uniform(kb, (1, fan_out), jnp.float32, -bound, bound)
        return w, b

    k1, k2, k3 = jax.random.split(key, 3)
    w1, b1 = linear(k1, D_IN, H1)
    w2, b2 = linear(k2, H1, H2)
    w3, b3 = linear(k3, H2, D_OUT)
    return w1, b1, w2, b2, w3, b3


def ref_forward_bf16(x, w1, b1, w2, b2, w3, b3):
    """Same math as the kernel: bf16 operands, exact f32 accumulation."""
    up = lambda a: a.astype(jnp.bfloat16).astype(jnp.float32)
    dot = functools.partial(jnp.dot, precision=jax.lax.Precision.HIGHEST)
    h1 = jnp.maximum(dot(up(x), up(w1)) + b1, 0.0)
    h2 = jnp.maximum(dot(up(h1), up(w2)) + b2, 0.0)
    return dot(up(h2), up(w3)) + b3


def ref_forward_f32(x, w1, b1, w2, b2, w3, b3):
    """Pure-f32 forward: the original PyTorch module semantics."""
    dot = functools.partial(jnp.dot, precision=jax.lax.Precision.HIGHEST)
    h1 = jnp.maximum(dot(x, w1) + b1, 0.0)
    h2 = jnp.maximum(dot(h1, w2) + b2, 0.0)
    return dot(h2, w3) + b3


if __name__ == "__main__":
    key = jax.random.PRNGKey(0)
    k_x, k_p = jax.random.split(key)

    B = 8  # small batch (padded to the TM=128 tile inside the wrapper)
    x = jax.random.normal(k_x, (B, D_IN), jnp.float32)
    params = init_params(k_p)

    out = mnist_nn_forward(x, *params)
    out = jax.block_until_ready(out)
    assert out.shape == (B, D_OUT)

    # Tight check vs. a reference computing exactly the kernel's math
    # (bf16 operands, f32 accumulation).
    ref = ref_forward_bf16(x, *params)
    err = float(jnp.max(jnp.abs(out - ref)))
    assert jnp.allclose(out, ref, atol=2e-3, rtol=2e-3), f"max|diff| vs bf16 ref = {err}"

    # Loose check vs. the pure-f32 forward (original module semantics).
    ref32 = ref_forward_f32(x, *params)
    err32 = float(jnp.max(jnp.abs(out - ref32)))
    assert err32 < 5e-2, f"max|diff| vs f32 ref = {err32}"

    print("KERNEL_OK")
</pallas_src>

<mosaic_0001>
module attributes {stable_mosaic.version = 11 : i64} {
  func.func @mlp_kernel(%arg0: i32, %arg1: memref<128x896xbf16, #tpu.memory_space<vmem>>, %arg2: memref<896x128xbf16, #tpu.memory_space<vmem>>, %arg3: memref<1x128xf32, #tpu.memory_space<vmem>>, %arg4: memref<128x256xbf16, #tpu.memory_space<vmem>>, %arg5: memref<1x256xf32, #tpu.memory_space<vmem>>, %arg6: memref<256x128xbf16, #tpu.memory_space<vmem>>, %arg7: memref<1x128xf32, #tpu.memory_space<vmem>>, %arg8: memref<128x128xf32, #tpu.memory_space<vmem>>) attributes {dimension_semantics = [#tpu.dimension_semantics<parallel>], iteration_bounds = array<i64: 1>, scalar_prefetch = 0 : i64, scratch_operands = 0 : i64, tpu.core_type = #tpu.core_type<tc>, window_params = [{transform_indices = @transform_0, window_bounds = array<i64: 128, 896>}, {pipeline_mode = #tpu.pipeline_mode<synchronous>, transform_indices = @transform_1, window_bounds = array<i64: 896, 128>}, {pipeline_mode = #tpu.pipeline_mode<synchronous>, transform_indices = @transform_2, window_bounds = array<i64: 1, 128>}, {pipeline_mode = #tpu.pipeline_mode<synchronous>, transform_indices = @transform_3, window_bounds = array<i64: 128, 256>}, {pipeline_mode = #tpu.pipeline_mode<synchronous>, transform_indices = @transform_4, window_bounds = array<i64: 1, 256>}, {pipeline_mode = #tpu.pipeline_mode<synchronous>, transform_indices = @transform_5, window_bounds = array<i64: 256, 128>}, {pipeline_mode = #tpu.pipeline_mode<synchronous>, transform_indices = @transform_6, window_bounds = array<i64: 1, 128>}, {transform_indices = @transform_7, window_bounds = array<i64: 128, 128>}]} {
    %c0 = arith.constant 0 : index
    %c0_0 = arith.constant 0 : index
    %0 = vector.load %arg1[%c0, %c0_0] : memref<128x896xbf16, #tpu.memory_space<vmem>>, vector<128x896xbf16>
    %c0_1 = arith.constant 0 : index
    %c0_2 = arith.constant 0 : index
    %1 = vector.load %arg2[%c0_1, %c0_2] : memref<896x128xbf16, #tpu.memory_space<vmem>>, vector<896x128xbf16>
    %cst = arith.constant dense<0.000000e+00> : vector<128x128xf32>
    %2 = tpu.matmul %0, %1, %cst {dimension_numbers = #tpu.dot_dimension_numbers<[1], [0], [0], [1], [0, 0, 1, 1], [], []>} : vector<128x896xbf16>, vector<896x128xbf16>, vector<128x128xf32> -> vector<128x128xf32>
    %c0_3 = arith.constant 0 : index
    %c0_4 = arith.constant 0 : index
    %3 = vector.load %arg3[%c0_3, %c0_4] : memref<1x128xf32, #tpu.memory_space<vmem>>, vector<1x128xf32>
    %4 = vector.broadcast %3 : vector<1x128xf32> to vector<128x128xf32>
    %5 = arith.addf %2, %4 : vector<128x128xf32>
    %cst_5 = arith.constant 0.000000e+00 : f32
    %6 = vector.broadcast %cst_5 : f32 to vector<128x128xf32>
    %7 = arith.maximumf %5, %6 : vector<128x128xf32>
    %8 = arith.truncf %7 : vector<128x128xf32> to vector<128x128xbf16>
    %c0_6 = arith.constant 0 : index
    %c0_7 = arith.constant 0 : index
    %9 = vector.load %arg4[%c0_6, %c0_7] : memref<128x256xbf16, #tpu.memory_space<vmem>>, vector<128x256xbf16>
    %cst_8 = arith.constant dense<0.000000e+00> : vector<128x256xf32>
    %10 = tpu.matmul %8, %9, %cst_8 {dimension_numbers = #tpu.dot_dimension_numbers<[1], [0], [0], [1], [0, 0, 1, 1], [], []>} : vector<128x128xbf16>, vector<128x256xbf16>, vector<128x256xf32> -> vector<128x256xf32>
    %c0_9 = arith.constant 0 : index
    %c0_10 = arith.constant 0 : index
    %11 = vector.load %arg5[%c0_9, %c0_10] : memref<1x256xf32, #tpu.memory_space<vmem>>, vector<1x256xf32>
    %12 = vector.broadcast %11 : vector<1x256xf32> to vector<128x256xf32>
    %13 = arith.addf %10, %12 : vector<128x256xf32>
    %cst_11 = arith.constant 0.000000e+00 : f32
    %14 = vector.broadcast %cst_11 : f32 to vector<128x256xf32>
    %15 = arith.maximumf %13, %14 : vector<128x256xf32>
    %16 = arith.truncf %15 : vector<128x256xf32> to vector<128x256xbf16>
    %c0_12 = arith.constant 0 : index
    %c0_13 = arith.constant 0 : index
    %17 = vector.load %arg6[%c0_12, %c0_13] : memref<256x128xbf16, #tpu.memory_space<vmem>>, vector<256x128xbf16>
    %cst_14 = arith.constant dense<0.000000e+00> : vector<128x128xf32>
    %18 = tpu.matmul %16, %17, %cst_14 {dimension_numbers = #tpu.dot_dimension_numbers<[1], [0], [0], [1], [0, 0, 1, 1], [], []>} : vector<128x256xbf16>, vector<256x128xbf16>, vector<128x128xf32> -> vector<128x128xf32>
    %c0_15 = arith.constant 0 : index
    %c0_16 = arith.constant 0 : index
    %19 = vector.load %arg7[%c0_15, %c0_16] : memref<1x128xf32, #tpu.memory_space<vmem>>, vector<1x128xf32>
    %20 = vector.broadcast %19 : vector<1x128xf32> to vector<128x128xf32>
    %21 = arith.addf %18, %20 : vector<128x128xf32>
    %c0_17 = arith.constant 0 : index
    %c0_18 = arith.constant 0 : index
    %22 = vector.load %arg8[%c0_17, %c0_18] : memref<128x128xf32, #tpu.memory_space<vmem>>, vector<128x128xf32>
    tpu.vector_store %arg8[%c0_17, %c0_18], %21 {strides = array<i32>} : memref<128x128xf32, #tpu.memory_space<vmem>>, vector<128x128xf32>,
    return
  }
  func.func @transform_0(%arg0: i32) -> (i32, i32) {
    %c0_i32 = arith.constant 0 : i32
    %c0_i32_0 = arith.constant 0 : i32
    return %arg0, %c0_i32 : i32, i32
  }
  func.func @transform_1(%arg0: i32) -> (i32, i32) {
    %c0_i32 = arith.constant 0 : i32
    %c0_i32_0 = arith.constant 0 : i32
    %c0_i32_1 = arith.constant 0 : i32
    return %c0_i32, %c0_i32_0 : i32, i32
  }
  func.func @transform_2(%arg0: i32) -> (i32, i32) {
    %c0_i32 = arith.constant 0 : i32
    %c0_i32_0 = arith.constant 0 : i32
    %c0_i32_1 = arith.constant 0 : i32
    return %c0_i32, %c0_i32_0 : i32, i32
  }
  func.func @transform_3(%arg0: i32) -> (i32, i32) {
    %c0_i32 = arith.constant 0 : i32
    %c0_i32_0 = arith.constant 0 : i32
    %c0_i32_1 = arith.constant 0 : i32
    return %c0_i32, %c0_i32_0 : i32, i32
  }
  func.func @transform_4(%arg0: i32) -> (i32, i32) {
    %c0_i32 = arith.constant 0 : i32
    %c0_i32_0 = arith.constant 0 : i32
    %c0_i32_1 = arith.constant 0 : i32
    return %c0_i32, %c0_i32_0 : i32, i32
  }
  func.func @transform_5(%arg0: i32) -> (i32, i32) {
    %c0_i32 = arith.constant 0 : i32
    %c0_i32_0 = arith.constant 0 : i32
    %c0_i32_1 = arith.constant 0 : i32
    return %c0_i32, %c0_i32_0 : i32, i32
  }
  func.func @transform_6(%arg0: i32) -> (i32, i32) {
    %c0_i32 = arith.constant 0 : i32
    %c0_i32_0 = arith.constant 0 : i32
    %c0_i32_1 = arith.constant 0 : i32
    return %c0_i32, %c0_i32_0 : i32, i32
  }
  func.func @transform_7(%arg0: i32) -> (i32, i32) {
    %c0_i32 = arith.constant 0 : i32
    %c0_i32_0 = arith.constant 0 : i32
    return %arg0, %c0_i32 : i32, i32
  }
}

</mosaic_0001>

<llo_original>
// kernel: tpu_custom_call.1
$region0: #{tpu_custom_call.1}
  #allocation0 [shape = 'u32[]', space=smem, size = 0x4, offset = 0x4, fixed_abs, tag = 'smem constant byte address 0x4 - core index']
  #allocation1 [shape = 'u32[72,128]{1,0:T(1,128)}', space=vmem, size = 0x9000, scoped, tag = 'internal scratch']
  %s0 = inlined_call_operand.hbm [shape: bf16[128,896], index: 0, kind: input, shape index: {}]
  %s1 = inlined_call_operand.hbm [shape: bf16[896,128], index: 1, kind: input, shape index: {}]
  %s2 = inlined_call_operand.vmem [shape: f32[1,128], index: 2, kind: input, shape index: {}]
  %s3 = inlined_call_operand.hbm [shape: bf16[128,256], index: 3, kind: input, shape index: {}]
  %s4 = inlined_call_operand.vmem [shape: f32[1,256], index: 4, kind: input, shape index: {}]
  %s5 = inlined_call_operand.hbm [shape: bf16[256,128], index: 5, kind: input, shape index: {}]
  %s6 = inlined_call_operand.vmem [shape: f32[1,128], index: 6, kind: input, shape index: {}]
  %s7 = inlined_call_operand.hbm [shape: f32[128,128], index: 7, kind: output, shape index: {}]
  %s8 = sld [smem:[#allocation0]]
  $region54: #{tpu_custom_call.1} parent=0
    _
  %s10 = ssub.s32 1, %s8
  %s11 = scalar_select 0, %s10, %s8
  $region1: #{tpu_custom_call.1} parent=0
    #allocation2 [shape = 'u8[229376]{0}', space=vmem, size = 0x38000, scoped, tag = 'input window, operand 0, single buffered']
    #allocation3 [shape = 's32[1]{0}', space=sflag, size = 0x4, scoped, tag = 'scoped memory for tpu_custom_call.1']
    #allocation4 [shape = 's32[1]{0}', space=sflag, size = 0x4, scoped, tag = 'scoped memory for tpu_custom_call.1']
    #allocation5 [shape = 'u8[229376]{0}', space=vmem, size = 0x38000, scoped, tag = 'input window, operand 1, single buffered']
    #allocation6 [shape = 's32[1]{0}', space=sflag, size = 0x4, scoped, tag = 'scoped memory for tpu_custom_call.1']
    #allocation7 [shape = 'u8[65536]{0}', space=vmem, size = 0x10000, scoped, tag = 'input window, operand 3, single buffered']
    #allocation8 [shape = 'u8[65536]{0}', space=vmem, size = 0x10000, scoped, tag = 'input window, operand 5, single buffered']
    #allocation9 [shape = 's32[1]{0}', space=sflag, size = 0x4, scoped, tag = 'scoped memory for tpu_custom_call.1']
    #allocation10 [shape = 'u8[65536]{0}', space=vmem, size = 0x10000, scoped, tag = 'output window, operand 0, single buffered']
    %12 = vsyncpa [#allocation3], 0
    %13 = vsyncpa [#allocation6], 0
    %14 = vsyncpa [#allocation9], 0
    %15 = vsyncpa [#allocation4], 0
    // Predicated region
    $region2: #{tpu_custom_call.1} parent=1 // pred_check
      _
    $region3: #{tpu_custom_call.1} parent=1 // pred_check_branch
      %17 = sbr.rel (0) target = $region5
    $region4: #{tpu_custom_call.1} parent=1 // pred_region
      %19 = vsyncadd [#allocation3], 0
      %s20 = sshll.u32 %s0, 4
      %s21 = int_to_ptr.hbm [resolvable:$true] %s20
      %s22 = sshll.u32 [#allocation2], 4
      %s23 = int_to_ptr.vmem [resolvable:$true] %s22
      %28 = dma.hbm_to_vmem [thread:$0]  %s21, 7168, %s23, [#allocation3], 448, 448, 28
    $region5: #{tpu_custom_call.1} parent=1 // pred_fallthru
      _
    // Predicated region
    $region6: #{tpu_custom_call.1} parent=1 // pred_check
      _
    $region7: #{tpu_custom_call.1} parent=1 // pred_check_branch
      %30 = sbr.rel (0) target = $region9
    $region8: #{tpu_custom_call.1} parent=1 // pred_region
      %32 = vsyncadd [#allocation6], 0
      %s33 = sshll.u32 %s1, 4
      %s34 = int_to_ptr.hbm [resolvable:$true] %s33
      %s35 = sshll.u32 [#allocation5], 4
      %s36 = int_to_ptr.vmem [resolvable:$true] %s35
      %41 = dma.hbm_to_vmem [thread:$0]  %s34, 7168, %s36, [#allocation6], 64, 64, 4
    $region9: #{tpu_custom_call.1} parent=1 // pred_fallthru
      _
    // Predicated region
    $region10: #{tpu_custom_call.1} parent=1 // pred_check
      _
    $region11: #{tpu_custom_call.1} parent=1 // pred_check_branch
      %43 = sbr.rel (0) target = $region13
    $region12: #{tpu_custom_call.1} parent=1 // pred_region
      _
    $region13: #{tpu_custom_call.1} parent=1 // pred_fallthru
      _
    // Predicated region
    $region14: #{tpu_custom_call.1} parent=1 // pred_check
      _
    $region15: #{tpu_custom_call.1} parent=1 // pred_check_branch
      %45 = sbr.rel (0) target = $region17
    $region16: #{tpu_custom_call.1} parent=1 // pred_region
      %47 = vsyncadd [#allocation6], 0
      %s48 = sshll.u32 %s3, 4
      %s49 = int_to_ptr.hbm [resolvable:$true] %s48
      %s50 = sshll.u32 [#allocation7], 4
      %s51 = int_to_ptr.vmem [resolvable:$true] %s50
      %56 = dma.hbm_to_vmem [thread:$0]  %s49, 2048, %s51, [#allocation6], 128, 128, 8
    $region17: #{tpu_custom_call.1} parent=1 // pred_fallthru
      _
    // Predicated region
    $region18: #{tpu_custom_call.1} parent=1 // pred_check
      _
    $region19: #{tpu_custom_call.1} parent=1 // pred_check_branch
      %58 = sbr.rel (0) target = $region21
    $region20: #{tpu_custom_call.1} parent=1 // pred_region
      _
    $region21: #{tpu_custom_call.1} parent=1 // pred_fallthru
      _
    // Predicated region
    $region22: #{tpu_custom_call.1} parent=1 // pred_check
      _
    $region23: #{tpu_custom_call.1} parent=1 // pred_check_branch
      %60 = sbr.rel (0) target = $region25
    $region24: #{tpu_custom_call.1} parent=1 // pred_region
      %62 = vsyncadd [#allocation9], 0
      %s63 = sshll.u32 %s5, 4
      %s64 = int_to_ptr.hbm [resolvable:$true] %s63
      %s65 = sshll.u32 [#allocation8], 4
      %s66 = int_to_ptr.vmem [resolvable:$true] %s65
      %71 = dma.hbm_to_vmem [thread:$0]  %s64, 2048, %s66, [#allocation9], 64, 64, 4
    $region25: #{tpu_custom_call.1} parent=1 // pred_fallthru
      _
    // Predicated region
    $region26: #{tpu_custom_call.1} parent=1 // pred_check
      _
    $region27: #{tpu_custom_call.1} parent=1 // pred_check_branch
      %73 = sbr.rel (0) target = $region29
    $region28: #{tpu_custom_call.1} parent=1 // pred_region
      _
    $region29: #{tpu_custom_call.1} parent=1 // pred_fallthru
      _
    // Predicated region
    $region30: #{tpu_custom_call.1} parent=1 // pred_check
      _
    $region31: #{tpu_custom_call.1} parent=1 // pred_check_branch
      %75 = sbr.rel (0) target = $region33
    $region32: #{tpu_custom_call.1} parent=1 // pred_region
      %77 = dma.done [#allocation3], 7168
    $region33: #{tpu_custom_call.1} parent=1 // pred_fallthru
      _
    // Predicated region
    $region34: #{tpu_custom_call.1} parent=1 // pred_check
      _
    $region35: #{tpu_custom_call.1} parent=1 // pred_check_branch
      %79 = sbr.rel (0) target = $region37
    $region36: #{tpu_custom_call.1} parent=1 // pred_region
      %81 = dma.done [#allocation6], 7168
    $region37: #{tpu_custom_call.1} parent=1 // pred_fallthru
      _
    // Predicated region
    $region38: #{tpu_custom_call.1} parent=1 // pred_check
      _
    $region39: #{tpu_custom_call.1} parent=1 // pred_check_branch
      %83 = sbr.rel (0) target = $region41
    $region40: #{tpu_custom_call.1} parent=1 // pred_region
      %85 = dma.done [#allocation6], 2048
    $region41: #{tpu_custom_call.1} parent=1 // pred_fallthru
      _
    // Predicated region
    $region42: #{tpu_custom_call.1} parent=1 // pred_check
      _
    $region43: #{tpu_custom_call.1} parent=1 // pred_check_branch
      %87 = sbr.rel (0) target = $region45
    $region44: #{tpu_custom_call.1} parent=1 // pred_region
      %89 = dma.done [#allocation9], 2048
    $region45: #{tpu_custom_call.1} parent=1 // pred_fallthru
      _
    %v90 = vld [vmem:[#allocation2] sm:$0xff]
    %v91 = vld [vmem:[#allocation2 + $0x8] sm:$0xff]
    %v92 = vld [vmem:[#allocation2 + $0x10] sm:$0xff]
    %v93 = vld [vmem:[#allocation2 + $0x18] sm:$0xf]
    %v94 = vld [vmem:[#allocation2 + $0x1c] sm:$0xff]
    %v95 = vld [vmem:[#allocation2 + $0x24] sm:$0xff]
    %v96 = vld [vmem:[#allocation2 + $0x2c] sm:$0xff]
    %v97 = vld [vmem:[#allocation2 + $0x34] sm:$0xf]
    %v98 = vld [vmem:[#allocation2 + $0x38] sm:$0xff]
    %v99 = vld [vmem:[#allocation2 + $0x40] sm:$0xff]
    %v100 = vld [vmem:[#allocation2 + $0x48] sm:$0xff]
    %v101 = vld [vmem:[#allocation2 + $0x50] sm:$0xf]
    %v102 = vld [vmem:[#allocation2 + $0x54] sm:$0xff]
    %v103 = vld [vmem:[#allocation2 + $0x5c] sm:$0xff]
    %v104 = vld [vmem:[#allocation2 + $0x64] sm:$0xff]
    %v105 = vld [vmem:[#allocation2 + $0x6c] sm:$0xf]
    %v106 = vld [vmem:[#allocation2 + $0x70] sm:$0xff]
    %v107 = vld [vmem:[#allocation2 + $0x78] sm:$0xff]
    %v108 = vld [vmem:[#allocation2 + $0x80] sm:$0xff]
    %v109 = vld [vmem:[#allocation2 + $0x88] sm:$0xf]
    %v110 = vld [vmem:[#allocation2 + $0x8c] sm:$0xff]
    %v111 = vld [vmem:[#allocation2 + $0x94] sm:$0xff]
    %v112 = vld [vmem:[#allocation2 + $0x9c] sm:$0xff]
    %v113 = vld [vmem:[#allocation2 + $0xa4] sm:$0xf]
    %v114 = vld [vmem:[#allocation2 + $0xa8] sm:$0xff]
    %v115 = vld [vmem:[#allocation2 + $0xb0] sm:$0xff]
    %v116 = vld [vmem:[#allocation2 + $0xb8] sm:$0xff]
    %v117 = vld [vmem:[#allocation2 + $0xc0] sm:$0xf]
    %v118 = vld [vmem:[#allocation2 + $0xc4] sm:$0xff]
    %v119 = vld [vmem:[#allocation2 + $0xcc] sm:$0xff]
    %v120 = vld [vmem:[#allocation2 + $0xd4] sm:$0xff]
    %v121 = vld [vmem:[#allocation2 + $0xdc] sm:$0xf]
    %v122 = vld [vmem:[#allocation2 + $0xe0] sm:$0xff]
    %v123 = vld [vmem:[#allocation2 + $0xe8] sm:$0xff]
    %v124 = vld [vmem:[#allocation2 + $0xf0] sm:$0xff]
    %v125 = vld [vmem:[#allocation2 + $0xf8] sm:$0xf]
    %v126 = vld [vmem:[#allocation2 + $0xfc] sm:$0xff]
    %v127 = vld [vmem:[#allocation2 + $0x104] sm:$0xff]
    %v128 = vld [vmem:[#allocation2 + $0x10c] sm:$0xff]
    %v129 = vld [vmem:[#allocation2 + $0x114] sm:$0xf]
    %v130 = vld [vmem:[#allocation2 + $0x118] sm:$0xff]
    %v131 = vld [vmem:[#allocation2 + $0x120] sm:$0xff]
    %v132 = vld [vmem:[#allocation2 + $0x128] sm:$0xff]
    %v133 = vld [vmem:[#allocation2 + $0x130] sm:$0xf]
    %v134 = vld [vmem:[#allocation2 + $0x134] sm:$0xff]
    %v135 = vld [vmem:[#allocation2 + $0x13c] sm:$0xff]
    %v136 = vld [vmem:[#allocation2 + $0x144] sm:$0xff]
    %v137 = vld [vmem:[#allocation2 + $0x14c] sm:$0xf]
    %v138 = vld [vmem:[#allocation2 + $0x150] sm:$0xff]
    %v139 = vld [vmem:[#allocation2 + $0x158] sm:$0xff]
    %v140 = vld [vmem:[#allocation2 + $0x160] sm:$0xff]
    %v141 = vld [vmem:[#allocation2 + $0x168] sm:$0xf]
    %v142 = vld [vmem:[#allocation2 + $0x16c] sm:$0xff]
    %v143 = vld [vmem:[#allocation2 + $0x174] sm:$0xff]
    %v144 = vld [vmem:[#allocation2 + $0x17c] sm:$0xff]
    %v145 = vld [vmem:[#allocation2 + $0x184] sm:$0xf]
    %v146 = vld [vmem:[#allocation2 + $0x188] sm:$0xff]
    %v147 = vld [vmem:[#allocation2 + $0x190] sm:$0xff]
    %v148 = vld [vmem:[#allocation2 + $0x198] sm:$0xff]
    %v149 = vld [vmem:[#allocation2 + $0x1a0] sm:$0xf]
    %v150 = vld [vmem:[#allocation2 + $0x1a4] sm:$0xff]
    %v151 = vld [vmem:[#allocation2 + $0x1ac] sm:$0xff]
    %v152 = vld [vmem:[#allocation2 + $0x1b4] sm:$0xff]
    %v153 = vld [vmem:[#allocation2 + $0x1bc] sm:$0xf]
    %v154 = vld [vmem:[#allocation5] sm:$0xf]
    %v155 = vld [vmem:[#allocation5 + $0x4] sm:$0xf]
    %v156 = vld [vmem:[#allocation5 + $0x8] sm:$0xf]
    %v157 = vld [vmem:[#allocation5 + $0xc] sm:$0xf]
    %v158 = vld [vmem:[#allocation5 + $0x10] sm:$0xf]
    %v159 = vld [vmem:[#allocation5 + $0x14] sm:$0xf]
    %v160 = vld [vmem:[#allocation5 + $0x18] sm:$0xf]
    %v161 = vld [vmem:[#allocation5 + $0x1c] sm:$0xf]
    %v162 = vld [vmem:[#allocation5 + $0x20] sm:$0xf]
    %v163 = vld [vmem:[#allocation5 + $0x24] sm:$0xf]
    %v164 = vld [vmem:[#allocation5 + $0x28] sm:$0xf]
    %v165 = vld [vmem:[#allocation5 + $0x2c] sm:$0xf]
    %v166 = vld [vmem:[#allocation5 + $0x30] sm:$0xf]
    %v167 = vld [vmem:[#allocation5 + $0x34] sm:$0xf]
    %v168 = vld [vmem:[#allocation5 + $0x38] sm:$0xf]
    %v169 = vld [vmem:[#allocation5 + $0x3c] sm:$0xf]
    %v170 = vld [vmem:[#allocation5 + $0x40] sm:$0xf]
    %v171 = vld [vmem:[#allocation5 + $0x44] sm:$0xf]
    %v172 = vld [vmem:[#allocation5 + $0x48] sm:$0xf]
    %v173 = vld [vmem:[#allocation5 + $0x4c] sm:$0xf]
    %v174 = vld [vmem:[#allocation5 + $0x50] sm:$0xf]
    %v175 = vld [vmem:[#allocation5 + $0x54] sm:$0xf]
    %v176 = vld [vmem:[#allocation5 + $0x58] sm:$0xf]
    %v177 = vld [vmem:[#allocation5 + $0x5c] sm:$0xf]
    %v178 = vld [vmem:[#allocation5 + $0x60] sm:$0xf]
    %v179 = vld [vmem:[#allocation5 + $0x64] sm:$0xf]
    %v180 = vld [vmem:[#allocation5 + $0x68] sm:$0xf]
    %v181 = vld [vmem:[#allocation5 + $0x6c] sm:$0xf]
    %v182 = vld [vmem:[#allocation5 + $0x70] sm:$0xf]
    %v183 = vld [vmem:[#allocation5 + $0x74] sm:$0xf]
    %v184 = vld [vmem:[#allocation5 + $0x78] sm:$0xf]
    %v185 = vld [vmem:[#allocation5 + $0x7c] sm:$0xf]
    %v186 = vld [vmem:[#allocation5 + $0x80] sm:$0xf]
    %v187 = vld [vmem:[#allocation5 + $0x84] sm:$0xf]
    %v188 = vld [vmem:[#allocation5 + $0x88] sm:$0xf]
    %v189 = vld [vmem:[#allocation5 + $0x8c] sm:$0xf]
    %v190 = vld [vmem:[#allocation5 + $0x90] sm:$0xf]
    %v191 = vld [vmem:[#allocation5 + $0x94] sm:$0xf]
    %v192 = vld [vmem:[#allocation5 + $0x98] sm:$0xf]
    %v193 = vld [vmem:[#allocation5 + $0x9c] sm:$0xf]
    %v194 = vld [vmem:[#allocation5 + $0xa0] sm:$0xf]
    %v195 = vld [vmem:[#allocation5 + $0xa4] sm:$0xf]
    %v196 = vld [vmem:[#allocation5 + $0xa8] sm:$0xf]
    %v197 = vld [vmem:[#allocation5 + $0xac] sm:$0xf]
    %v198 = vld [vmem:[#allocation5 + $0xb0] sm:$0xf]
    %v199 = vld [vmem:[#allocation5 + $0xb4] sm:$0xf]
    %v200 = vld [vmem:[#allocation5 + $0xb8] sm:$0xf]
    %v201 = vld [vmem:[#allocation5 + $0xbc] sm:$0xf]
    %v202 = vld [vmem:[#allocation5 + $0xc0] sm:$0xf]
    %v203 = vld [vmem:[#allocation5 + $0xc4] sm:$0xf]
    %v204 = vld [vmem:[#allocation5 + $0xc8] sm:$0xf]
    %v205 = vld [vmem:[#allocation5 + $0xcc] sm:$0xf]
    %v206 = vld [vmem:[#allocation5 + $0xd0] sm:$0xf]
    %v207 = vld [vmem:[#allocation5 + $0xd4] sm:$0xf]
    %v208 = vld [vmem:[#allocation5 + $0xd8] sm:$0xf]
    %v209 = vld [vmem:[#allocation5 + $0xdc] sm:$0xf]
    %v210 = vld [vmem:[#allocation5 + $0xe0] sm:$0xf]
    %v211 = vld [vmem:[#allocation5 + $0xe4] sm:$0xf]
    %v212 = vld [vmem:[#allocation5 + $0xe8] sm:$0xf]
    %v213 = vld [vmem:[#allocation5 + $0xec] sm:$0xf]
    %v214 = vld [vmem:[#allocation5 + $0xf0] sm:$0xf]
    %v215 = vld [vmem:[#allocation5 + $0xf4] sm:$0xf]
    %v216 = vld [vmem:[#allocation5 + $0xf8] sm:$0xf]
    %v217 = vld [vmem:[#allocation5 + $0xfc] sm:$0xf]
    %v218 = vld [vmem:[#allocation5 + $0x100] sm:$0xf]
    %v219 = vld [vmem:[#allocation5 + $0x104] sm:$0xf]
    %v220 = vld [vmem:[#allocation5 + $0x108] sm:$0xf]
    %v221 = vld [vmem:[#allocation5 + $0x10c] sm:$0xf]
    %v222 = vld [vmem:[#allocation5 + $0x110] sm:$0xf]
    %v223 = vld [vmem:[#allocation5 + $0x114] sm:$0xf]
    %v224 = vld [vmem:[#allocation5 + $0x118] sm:$0xf]
    %v225 = vld [vmem:[#allocation5 + $0x11c] sm:$0xf]
    %v226 = vld [vmem:[#allocation5 + $0x120] sm:$0xf]
    %v227 = vld [vmem:[#allocation5 + $0x124] sm:$0xf]
    %v228 = vld [vmem:[#allocation5 + $0x128] sm:$0xf]
    %v229 = vld [vmem:[#allocation5 + $0x12c] sm:$0xf]
    %v230 = vld [vmem:[#allocation5 + $0x130] sm:$0xf]
    %v231 = vld [vmem:[#allocation5 + $0x134] sm:$0xf]
    %v232 = vld [vmem:[#allocation5 + $0x138] sm:$0xf]
    %v233 = vld [vmem:[#allocation5 + $0x13c] sm:$0xf]
    %v234 = vld [vmem:[#allocation5 + $0x140] sm:$0xf]
    %v235 = vld [vmem:[#allocation5 + $0x144] sm:$0xf]
    %v236 = vld [vmem:[#allocation5 + $0x148] sm:$0xf]
    %v237 = vld [vmem:[#allocation5 + $0x14c] sm:$0xf]
    %v238 = vld [vmem:[#allocation5 + $0x150] sm:$0xf]
    %v239 = vld [vmem:[#allocation5 + $0x154] sm:$0xf]
    %v240 = vld [vmem:[#allocation5 + $0x158] sm:$0xf]
    %v241 = vld [vmem:[#allocation5 + $0x15c] sm:$0xf]
    %v242 = vld [vmem:[#allocation5 + $0x160] sm:$0xf]
    %v243 = vld [vmem:[#allocation5 + $0x164] sm:$0xf]
    %v244 = vld [vmem:[#allocation5 + $0x168] sm:$0xf]
    %v245 = vld [vmem:[#allocation5 + $0x16c] sm:$0xf]
    %v246 = vld [vmem:[#allocation5 + $0x170] sm:$0xf]
    %v247 = vld [vmem:[#allocation5 + $0x174] sm:$0xf]
    %v248 = vld [vmem:[#allocation5 + $0x178] sm:$0xf]
    %v249 = vld [vmem:[#allocation5 + $0x17c] sm:$0xf]
    %v250 = vld [vmem:[#allocation5 + $0x180] sm:$0xf]
    %v251 = vld [vmem:[#allocation5 + $0x184] sm:$0xf]
    %v252 = vld [vmem:[#allocation5 + $0x188] sm:$0xf]
    %v253 = vld [vmem:[#allocation5 + $0x18c] sm:$0xf]
    %v254 = vld [vmem:[#allocation5 + $0x190] sm:$0xf]
    %v255 = vld [vmem:[#allocation5 + $0x194] sm:$0xf]
    %v256 = vld [vmem:[#allocation5 + $0x198] sm:$0xf]
    %v257 = vld [vmem:[#allocation5 + $0x19c] sm:$0xf]
    %v258 = vld [vmem:[#allocation5 + $0x1a0] sm:$0xf]
    %v259 = vld [vmem:[#allocation5 + $0x1a4] sm:$0xf]
    %v260 = vld [vmem:[#allocation5 + $0x1a8] sm:$0xf]
    %v261 = vld [vmem:[#allocation5 + $0x1ac] sm:$0xf]
    %v262 = vld [vmem:[#allocation5 + $0x1b0] sm:$0xf]
    %v263 = vld [vmem:[#allocation5 + $0x1b4] sm:$0xf]
    %v264 = vld [vmem:[#allocation5 + $0x1b8] sm:$0xf]
    %v265 = vld [vmem:[#allocation5 + $0x1bc] sm:$0xf]
    %v266 = vld [vmem:[%s2] sm:$0x1]
    %v268 = vperm.slane %v266, 0
    %v334 = vunpack.c.l.b16 %v90
    %v335 = vunpack.c.h.b16 %v90
    %v336 = vunpack.c.l.b16 %v91
    %v337 = vunpack.c.h.b16 %v91
    %v338 = vunpack.c.l.b16 %v92
    %v339 = vunpack.c.h.b16 %v92
    %v340 = vunpack.c.l.b16 %v93
    %v341 = vunpack.c.l.b16 %v94
    %v342 = vunpack.c.h.b16 %v94
    %v343 = vunpack.c.l.b16 %v95
    %v344 = vunpack.c.h.b16 %v95
    %v345 = vunpack.c.l.b16 %v96
    %v346 = vunpack.c.h.b16 %v96
    %v347 = vunpack.c.l.b16 %v97
    %v348 = vunpack.c.l.b16 %v98
    %v349 = vunpack.c.h.b16 %v98
    %v350 = vunpack.c.l.b16 %v99
    %v351 = vunpack.c.h.b16 %v99
    %v352 = vunpack.c.l.b16 %v100
    %v353 = vunpack.c.h.b16 %v100
    %v354 = vunpack.c.l.b16 %v101
    %v355 = vunpack.c.l.b16 %v102
    %v356 = vunpack.c.h.b16 %v102
    %v357 = vunpack.c.l.b16 %v103
    %v358 = vunpack.c.h.b16 %v103
    %v359 = vunpack.c.l.b16 %v104
    %v360 = vunpack.c.h.b16 %v104
    %v361 = vunpack.c.l.b16 %v105
    %v362 = vunpack.c.l.b16 %v106
    %v363 = vunpack.c.h.b16 %v106
    %v364 = vunpack.c.l.b16 %v107
    %v365 = vunpack.c.h.b16 %v107
    %v366 = vunpack.c.l.b16 %v108
    %v367 = vunpack.c.h.b16 %v108
    %v368 = vunpack.c.l.b16 %v109
    %v369 = vunpack.c.l.b16 %v110
    %v370 = vunpack.c.h.b16 %v110
    %v371 = vunpack.c.l.b16 %v111
    %v372 = vunpack.c.h.b16 %v111
    %v373 = vunpack.c.l.b16 %v112
    %v374 = vunpack.c.h.b16 %v112
    %v375 = vunpack.c.l.b16 %v113
    %v376 = vunpack.c.l.b16 %v114
    %v377 = vunpack.c.h.b16 %v114
    %v378 = vunpack.c.l.b16 %v115
    %v379 = vunpack.c.h.b16 %v115
    %v380 = vunpack.c.l.b16 %v116
    %v381 = vunpack.c.h.b16 %v116
    %v382 = vunpack.c.l.b16 %v117
    %v383 = vunpack.c.l.b16 %v118
    %v384 = vunpack.c.h.b16 %v118
    %v385 = vunpack.c.l.b16 %v119
    %v386 = vunpack.c.h.b16 %v119
    %v387 = vunpack.c.l.b16 %v120
    %v388 = vunpack.c.h.b16 %v120
    %v389 = vunpack.c.l.b16 %v121
    %v390 = vunpack.c.l.b16 %v122
    %v391 = vunpack.c.h.b16 %v122
    %v392 = vunpack.c.l.b16 %v123
    %v393 = vunpack.c.h.b16 %v123
    %v394 = vunpack.c.l.b16 %v124
    %v395 = vunpack.c.h.b16 %v124
    %v396 = vunpack.c.l.b16 %v125
    %v397 = vunpack.c.l.b16 %v126
    %v398 = vunpack.c.h.b16 %v126
    %v399 = vunpack.c.l.b16 %v127
    %v400 = vunpack.c.h.b16 %v127
    %v401 = vunpack.c.l.b16 %v128
    %v402 = vunpack.c.h.b16 %v128
    %v403 = vunpack.c.l.b16 %v129
    %v404 = vunpack.c.l.b16 %v130
    %v405 = vunpack.c.h.b16 %v130
    %v406 = vunpack.c.l.b16 %v131
    %v407 = vunpack.c.h.b16 %v131
    %v408 = vunpack.c.l.b16 %v132
    %v409 = vunpack.c.h.b16 %v132
    %v410 = vunpack.c.l.b16 %v133
    %v411 = vunpack.c.l.b16 %v134
    %v412 = vunpack.c.h.b16 %v134
    %v413 = vunpack.c.l.b16 %v135
    %v414 = vunpack.c.h.b16 %v135
    %v415 = vunpack.c.l.b16 %v136
    %v416 = vunpack.c.h.b16 %v136
    %v417 = vunpack.c.l.b16 %v137
    %v418 = vunpack.c.l.b16 %v138
    %v419 = vunpack.c.h.b16 %v138
    %v420 = vunpack.c.l.b16 %v139
    %v421 = vunpack.c.h.b16 %v139
    %v422 = vunpack.c.l.b16 %v140
    %v423 = vunpack.c.h.b16 %v140
    %v424 = vunpack.c.l.b16 %v141
    %v425 = vunpack.c.l.b16 %v142
    %v426 = vunpack.c.h.b16 %v142
    %v427 = vunpack.c.l.b16 %v143
    %v428 = vunpack.c.h.b16 %v143
    %v429 = vunpack.c.l.b16 %v144
    %v430 = vunpack.c.h.b16 %v144
    %v431 = vunpack.c.l.b16 %v145
    %v432 = vunpack.c.l.b16 %v146
    %v433 = vunpack.c.h.b16 %v146
    %v434 = vunpack.c.l.b16 %v147
    %v435 = vunpack.c.h.b16 %v147
    %v436 = vunpack.c.l.b16 %v148
    %v437 = vunpack.c.h.b16 %v148
    %v438 = vunpack.c.l.b16 %v149
    %v439 = vunpack.c.l.b16 %v150
    %v440 = vunpack.c.h.b16 %v150
    %v441 = vunpack.c.l.b16 %v151
    %v442 = vunpack.c.h.b16 %v151
    %v443 = vunpack.c.l.b16 %v152
    %v444 = vunpack.c.h.b16 %v152
    %v445 = vunpack.c.l.b16 %v153
    %v446 = vpack.c.b16 %v341, %v334
    %v447 = vpack.c.b16 %v342, %v335
    %v448 = vpack.c.b16 %v343, %v336
    %v449 = vpack.c.b16 %v344, %v337
    %v450 = vpack.c.b16 %v345, %v338
    %v451 = vpack.c.b16 %v346, %v339
    %v452 = vpack.c.b16 %v347, %v340
    %v453 = vpack.c.b16 %v355, %v348
    %v454 = vpack.c.b16 %v356, %v349
    %v455 = vpack.c.b16 %v357, %v350
    %v456 = vpack.c.b16 %v358, %v351
    %v457 = vpack.c.b16 %v359, %v352
    %v458 = vpack.c.b16 %v360, %v353
    %v459 = vpack.c.b16 %v361, %v354
    %v460 = vpack.c.b16 %v369, %v362
    %v461 = vpack.c.b16 %v370, %v363
    %v462 = vpack.c.b16 %v371, %v364
    %v463 = vpack.c.b16 %v372, %v365
    %v464 = vpack.c.b16 %v373, %v366
    %v465 = vpack.c.b16 %v374, %v367
    %v466 = vpack.c.b16 %v375, %v368
    %v467 = vpack.c.b16 %v383, %v376
    %v468 = vpack.c.b16 %v384, %v377
    %v469 = vpack.c.b16 %v385, %v378
    %v470 = vpack.c.b16 %v386, %v379
    %v471 = vpack.c.b16 %v387, %v380
    %v472 = vpack.c.b16 %v388, %v381
    %v473 = vpack.c.b16 %v389, %v382
    %v474 = vpack.c.b16 %v397, %v390
    %v475 = vpack.c.b16 %v398, %v391
    %v476 = vpack.c.b16 %v399, %v392
    %v477 = vpack.c.b16 %v400, %v393
    %v478 = vpack.c.b16 %v401, %v394
    %v479 = vpack.c.b16 %v402, %v395
    %v480 = vpack.c.b16 %v403, %v396
    %v481 = vpack.c.b16 %v411, %v404
    %v482 = vpack.c.b16 %v412, %v405
    %v483 = vpack.c.b16 %v413, %v406
    %v484 = vpack.c.b16 %v414, %v407
    %v485 = vpack.c.b16 %v415, %v408
    %v486 = vpack.c.b16 %v416, %v409
    %v487 = vpack.c.b16 %v417, %v410
    %v488 = vpack.c.b16 %v425, %v418
    %v489 = vpack.c.b16 %v426, %v419
    %v490 = vpack.c.b16 %v427, %v420
    %v491 = vpack.c.b16 %v428, %v421
    %v492 = vpack.c.b16 %v429, %v422
    %v493 = vpack.c.b16 %v430, %v423
    %v494 = vpack.c.b16 %v431, %v424
    %v495 = vpack.c.b16 %v439, %v432
    %v496 = vpack.c.b16 %v440, %v433
    %v497 = vpack.c.b16 %v441, %v434
    %v498 = vpack.c.b16 %v442, %v435
    %v499 = vpack.c.b16 %v443, %v436
    %v500 = vpack.c.b16 %v444, %v437
    %v501 = vpack.c.b16 %v445, %v438
    %v670 = vunpack.c.l.b16 %v154
    %v671 = vunpack.c.l.b16 %v155
    %v672 = vunpack.c.l.b16 %v156
    %v673 = vunpack.c.l.b16 %v157
    %v674 = vunpack.c.l.b16 %v158
    %v675 = vunpack.c.l.b16 %v159
    %v676 = vunpack.c.l.b16 %v160
    %v677 = vunpack.c.l.b16 %v161
    %v678 = vunpack.c.l.b16 %v162
    %v679 = vunpack.c.l.b16 %v163
    %v680 = vunpack.c.l.b16 %v164
    %v681 = vunpack.c.l.b16 %v165
    %v682 = vunpack.c.l.b16 %v166
    %v683 = vunpack.c.l.b16 %v167
    %v684 = vunpack.c.l.b16 %v168
    %v685 = vunpack.c.l.b16 %v169
    %v686 = vunpack.c.l.b16 %v170
    %v687 = vunpack.c.l.b16 %v171
    %v688 = vunpack.c.l.b16 %v172
    %v689 = vunpack.c.l.b16 %v173
    %v690 = vunpack.c.l.b16 %v174
    %v691 = vunpack.c.l.b16 %v175
    %v692 = vunpack.c.l.b16 %v176
    %v693 = vunpack.c.l.b16 %v177
    %v694 = vunpack.c.l.b16 %v178
    %v695 = vunpack.c.l.b16 %v179
    %v696 = vunpack.c.l.b16 %v180
    %v697 = vunpack.c.l.b16 %v181
    %v698 = vunpack.c.l.b16 %v182
    %v699 = vunpack.c.l.b16 %v183
    %v700 = vunpack.c.l.b16 %v184
    %v701 = vunpack.c.l.b16 %v185
    %v702 = vunpack.c.l.b16 %v186
    %v703 = vunpack.c.l.b16 %v187
    %v704 = vunpack.c.l.b16 %v188
    %v705 = vunpack.c.l.b16 %v189
    %v706 = vunpack.c.l.b16 %v190
    %v707 = vunpack.c.l.b16 %v191
    %v708 = vunpack.c.l.b16 %v192
    %v709 = vunpack.c.l.b16 %v193
    %v710 = vunpack.c.l.b16 %v194
    %v711 = vunpack.c.l.b16 %v195
    %v712 = vunpack.c.l.b16 %v196
    %v713 = vunpack.c.l.b16 %v197
    %v714 = vunpack.c.l.b16 %v198
    %v715 = vunpack.c.l.b16 %v199
    %v716 = vunpack.c.l.b16 %v200
    %v717 = vunpack.c.l.b16 %v201
    %v718 = vunpack.c.l.b16 %v202
    %v719 = vunpack.c.l.b16 %v203
    %v720 = vunpack.c.l.b16 %v204
    %v721 = vunpack.c.l.b16 %v205
    %v722 = vunpack.c.l.b16 %v206
    %v723 = vunpack.c.l.b16 %v207
    %v724 = vunpack.c.l.b16 %v208
    %v725 = vunpack.c.l.b16 %v209
    %v726 = vunpack.c.l.b16 %v210
    %v727 = vunpack.c.l.b16 %v211
    %v728 = vunpack.c.l.b16 %v212
    %v729 = vunpack.c.l.b16 %v213
    %v730 = vunpack.c.l.b16 %v214
    %v731 = vunpack.c.l.b16 %v215
    %v732 = vunpack.c.l.b16 %v216
    %v733 = vunpack.c.l.b16 %v217
    %v734 = vunpack.c.l.b16 %v218
    %v735 = vunpack.c.l.b16 %v219
    %v736 = vunpack.c.l.b16 %v220
    %v737 = vunpack.c.l.b16 %v221
    %v738 = vunpack.c.l.b16 %v222
    %v739 = vunpack.c.l.b16 %v223
    %v740 = vunpack.c.l.b16 %v224
    %v741 = vunpack.c.l.b16 %v225
    %v742 = vunpack.c.l.b16 %v226
    %v743 = vunpack.c.l.b16 %v227
    %v744 = vunpack.c.l.b16 %v228
    %v745 = vunpack.c.l.b16 %v229
    %v746 = vunpack.c.l.b16 %v230
    %v747 = vunpack.c.l.b16 %v231
    %v748 = vunpack.c.l.b16 %v232
    %v749 = vunpack.c.l.b16 %v233
    %v750 = vunpack.c.l.b16 %v234
    %v751 = vunpack.c.l.b16 %v235
    %v752 = vunpack.c.l.b16 %v236
    %v753 = vunpack.c.l.b16 %v237
    %v754 = vunpack.c.l.b16 %v238
    %v755 = vunpack.c.l.b16 %v239
    %v756 = vunpack.c.l.b16 %v240
    %v757 = vunpack.c.l.b16 %v241
    %v758 = vunpack.c.l.b16 %v242
    %v759 = vunpack.c.l.b16 %v243
    %v760 = vunpack.c.l.b16 %v244
    %v761 = vunpack.c.l.b16 %v245
    %v762 = vunpack.c.l.b16 %v246
    %v763 = vunpack.c.l.b16 %v247
    %v764 = vunpack.c.l.b16 %v248
    %v765 = vunpack.c.l.b16 %v249
    %v766 = vunpack.c.l.b16 %v250
    %v767 = vunpack.c.l.b16 %v251
    %v768 = vunpack.c.l.b16 %v252
    %v769 = vunpack.c.l.b16 %v253
    %v770 = vunpack.c.l.b16 %v254
    %v771 = vunpack.c.l.b16 %v255
    %v772 = vunpack.c.l.b16 %v256
    %v773 = vunpack.c.l.b16 %v257
    %v774 = vunpack.c.l.b16 %v258
    %v775 = vunpack.c.l.b16 %v259
    %v776 = vunpack.c.l.b16 %v260
    %v777 = vunpack.c.l.b16 %v261
    %v778 = vunpack.c.l.b16 %v262
    %v779 = vunpack.c.l.b16 %v263
    %v780 = vunpack.c.l.b16 %v264
    %v781 = vunpack.c.l.b16 %v265
    %v782 = vpack.c.b16 %v671, %v670
    %v783 = vpack.c.b16 %v673, %v672
    %v784 = vpack.c.b16 %v675, %v674
    %v785 = vpack.c.b16 %v677, %v676
    %v786 = vpack.c.b16 %v679, %v678
    %v787 = vpack.c.b16 %v681, %v680
    %v788 = vpack.c.b16 %v683, %v682
    %v789 = vpack.c.b16 %v685, %v684
    %v790 = vpack.c.b16 %v687, %v686
    %v791 = vpack.c.b16 %v689, %v688
    %v792 = vpack.c.b16 %v691, %v690
    %v793 = vpack.c.b16 %v693, %v692
    %v794 = vpack.c.b16 %v695, %v694
    %v795 = vpack.c.b16 %v697, %v696
    %v796 = vpack.c.b16 %v699, %v698
    %v797 = vpack.c.b16 %v701, %v700
    %v798 = vpack.c.b16 %v703, %v702
    %v799 = vpack.c.b16 %v705, %v704
    %v800 = vpack.c.b16 %v707, %v706
    %v801 = vpack.c.b16 %v709, %v708
    %v802 = vpack.c.b16 %v711, %v710
    %v803 = vpack.c.b16 %v713, %v712
    %v804 = vpack.c.b16 %v715, %v714
    %v805 = vpack.c.b16 %v717, %v716
    %v806 = vpack.c.b16 %v719, %v718
    %v807 = vpack.c.b16 %v721, %v720
    %v808 = vpack.c.b16 %v723, %v722
    %v809 = vpack.c.b16 %v725, %v724
    %v810 = vpack.c.b16 %v727, %v726
    %v811 = vpack.c.b16 %v729, %v728
    %v812 = vpack.c.b16 %v731, %v730
    %v813 = vpack.c.b16 %v733, %v732
    %v814 = vpack.c.b16 %v735, %v734
    %v815 = vpack.c.b16 %v737, %v736
    %v816 = vpack.c.b16 %v739, %v738
    %v817 = vpack.c.b16 %v741, %v740
    %v818 = vpack.c.b16 %v743, %v742
    %v819 = vpack.c.b16 %v745, %v744
    %v820 = vpack.c.b16 %v747, %v746
    %v821 = vpack.c.b16 %v749, %v748
    %v822 = vpack.c.b16 %v751, %v750
    %v823 = vpack.c.b16 %v753, %v752
    %v824 = vpack.c.b16 %v755, %v754
    %v825 = vpack.c.b16 %v757, %v756
    %v826 = vpack.c.b16 %v759, %v758
    %v827 = vpack.c.b16 %v761, %v760
    %v828 = vpack.c.b16 %v763, %v762
    %v829 = vpack.c.b16 %v765, %v764
    %v830 = vpack.c.b16 %v767, %v766
    %v831 = vpack.c.b16 %v769, %v768
    %v832 = vpack.c.b16 %v771, %v770
    %v833 = vpack.c.b16 %v773, %v772
    %v834 = vpack.c.b16 %v775, %v774
    %v835 = vpack.c.b16 %v777, %v776
    %v836 = vpack.c.b16 %v779, %v778
    %v837 = vpack.c.b16 %v781, %v780
    %894 = vmatpush.bf16.msra.mxu0 %v789
    %895 = vmatpush.bf16.msra.mxu0 %v788
    %896 = vmatpush.bf16.msra.mxu0 %v787
    %897 = vmatpush.bf16.msra.mxu0 %v786
    %898 = vmatpush.bf16.msra.mxu0 %v785
    %899 = vmatpush.bf16.msra.mxu0 %v784
    %900 = vmatpush.bf16.msra.mxu0 %v783
    %901 = vmatpush.bf16.msra.mxu0 %v782
    %902 = vmatmul.bf16.gmra.mxu0 %v446
    %v903 = vpop.f32.mrf.mxu0
    %v904 = vadd.f32 %v268, %v903
    %v905 = vpop.f32.mrf.mxu0
    %v906 = vadd.f32 %v268, %v905
    %907 = vmatmul.bf16.gmra.mxu0 %v453
    %v908 = vpop.f32.mrf.mxu0
    %v909 = vadd.f32 %v268, %v908
    %v910 = vpop.f32.mrf.mxu0
    %v911 = vadd.f32 %v268, %v910
    %912 = vmatmul.bf16.gmra.mxu0 %v460
    %v913 = vpop.f32.mrf.mxu0
    %v914 = vadd.f32 %v268, %v913
    %v915 = vpop.f32.mrf.mxu0
    %v916 = vadd.f32 %v268, %v915
    %917 = vmatmul.bf16.gmra.mxu0 %v467
    %v918 = vpop.f32.mrf.mxu0
    %v919 = vadd.f32 %v268, %v918
    %v920 = vpop.f32.mrf.mxu0
    %v921 = vadd.f32 %v268, %v920
    %922 = vmatmul.bf16.gmra.mxu0 %v474
    %v923 = vpop.f32.mrf.mxu0
    %v924 = vadd.f32 %v268, %v923
    %v925 = vpop.f32.mrf.mxu0
    %v926 = vadd.f32 %v268, %v925
    %927 = vmatmul.bf16.gmra.mxu0 %v481
    %v928 = vpop.f32.mrf.mxu0
    %v929 = vadd.f32 %v268, %v928
    %v930 = vpop.f32.mrf.mxu0
    %v931 = vadd.f32 %v268, %v930
    %932 = vmatmul.bf16.gmra.mxu0 %v488
    %v933 = vpop.f32.mrf.mxu0
    %v934 = vadd.f32 %v268, %v933
    %v935 = vpop.f32.mrf.mxu0
    %v936 = vadd.f32 %v268, %v935
    %937 = vmatmul.bf16.gmra.mxu0 %v495
    %v938 = vpop.f32.mrf.mxu0
    %v939 = vadd.f32 %v268, %v938
    %v940 = vpop.f32.mrf.mxu0
    %v941 = vadd.f32 %v268, %v940
    %942 = vdwg.mxu0
    %943 = vmatpush.bf16.msra.mxu0 %v797
    %944 = vmatpush.bf16.msra.mxu0 %v796
    %945 = vmatpush.bf16.msra.mxu0 %v795
    %946 = vmatpush.bf16.msra.mxu0 %v794
    %947 = vmatpush.bf16.msra.mxu0 %v793
    %948 = vmatpush.bf16.msra.mxu0 %v792
    %949 = vmatpush.bf16.msra.mxu0 %v791
    %950 = vmatpush.bf16.msra.mxu0 %v790
    %951 = vmatmul.bf16.gmra.mxu0 %v447
    %v952 = vpop.f32.mrf.mxu0
    %v953 = vadd.f32 %v904, %v952
    %v954 = vpop.f32.mrf.mxu0
    %v955 = vadd.f32 %v906, %v954
    %956 = vmatmul.bf16.gmra.mxu0 %v454
    %v957 = vpop.f32.mrf.mxu0
    %v958 = vadd.f32 %v909, %v957
    %v959 = vpop.f32.mrf.mxu0
    %v960 = vadd.f32 %v911, %v959
    %961 = vmatmul.bf16.gmra.mxu0 %v461
    %v962 = vpop.f32.mrf.mxu0
    %v963 = vadd.f32 %v914, %v962
    %v964 = vpop.f32.mrf.mxu0
    %v965 = vadd.f32 %v916, %v964
    %966 = vmatmul.bf16.gmra.mxu0 %v468
    %v967 = vpop.f32.mrf.mxu0
    %v968 = vadd.f32 %v919, %v967
    %v969 = vpop.f32.mrf.mxu0
    %v970 = vadd.f32 %v921, %v969
    %971 = vmatmul.bf16.gmra.mxu0 %v475
    %v972 = vpop.f32.mrf.mxu0
    %v973 = vadd.f32 %v924, %v972
    %v974 = vpop.f32.mrf.mxu0
    %v975 = vadd.f32 %v926, %v974
    %976 = vmatmul.bf16.gmra.mxu0 %v482
    %v977 = vpop.f32.mrf.mxu0
    %v978 = vadd.f32 %v929, %v977
    %v979 = vpop.f32.mrf.mxu0
    %v980 = vadd.f32 %v931, %v979
    %981 = vmatmul.bf16.gmra.mxu0 %v489
    %v982 = vpop.f32.mrf.mxu0
    %v983 = vadd.f32 %v934, %v982
    %v984 = vpop.f32.mrf.mxu0
    %v985 = vadd.f32 %v936, %v984
    %986 = vmatmul.bf16.gmra.mxu0 %v496
    %v987 = vpop.f32.mrf.mxu0
    %v988 = vadd.f32 %v939, %v987
    %v989 = vpop.f32.mrf.mxu0
    %v990 = vadd.f32 %v941, %v989
    %991 = vdwg.mxu0
    %992 = vmatpush.bf16.msra.mxu0 %v805
    %993 = vmatpush.bf16.msra.mxu0 %v804
    %994 = vmatpush.bf16.msra.mxu0 %v803
    %995 = vmatpush.bf16.msra.mxu0 %v802
    %996 = vmatpush.bf16.msra.mxu0 %v801
    %997 = vmatpush.bf16.msra.mxu0 %v800
    %998 = vmatpush.bf16.msra.mxu0 %v799
    %999 = vmatpush.bf16.msra.mxu0 %v798
    %1000 = vmatmul.bf16.gmra.mxu0 %v448
    %v1001 = vpop.f32.mrf.mxu0
    %v1002 = vadd.f32 %v953, %v1001
    %v1003 = vpop.f32.mrf.mxu0
    %v1004 = vadd.f32 %v955, %v1003
    %1005 = vmatmul.bf16.gmra.mxu0 %v455
    %v1006 = vpop.f32.mrf.mxu0
    %v1007 = vadd.f32 %v958, %v1006
    %v1008 = vpop.f32.mrf.mxu0
    %v1009 = vadd.f32 %v960, %v1008
    %1010 = vmatmul.bf16.gmra.mxu0 %v462
    %v1011 = vpop.f32.mrf.mxu0
    %v1012 = vadd.f32 %v963, %v1011
    %v1013 = vpop.f32.mrf.mxu0
    %v1014 = vadd.f32 %v965, %v1013
    %1015 = vmatmul.bf16.gmra.mxu0 %v469
    %v1016 = vpop.f32.mrf.mxu0
    %v1017 = vadd.f32 %v968, %v1016
    %v1018 = vpop.f32.mrf.mxu0
    %v1019 = vadd.f32 %v970, %v1018
    %1020 = vmatmul.bf16.gmra.mxu0 %v476
    %v1021 = vpop.f32.mrf.mxu0
    %v1022 = vadd.f32 %v973, %v1021
    %v1023 = vpop.f32.mrf.mxu0
    %v1024 = vadd.f32 %v975, %v1023
    %1025 = vmatmul.bf16.gmra.mxu0 %v483
    %v1026 = vpop.f32.mrf.mxu0
    %v1027 = vadd.f32 %v978, %v1026
    %v1028 = vpop.f32.mrf.mxu0
    %v1029 = vadd.f32 %v980, %v1028
    %1030 = vmatmul.bf16.gmra.mxu0 %v490
    %v1031 = vpop.f32.mrf.mxu0
    %v1032 = vadd.f32 %v983, %v1031
    %v1033 = vpop.f32.mrf.mxu0
    %v1034 = vadd.f32 %v985, %v1033
    %1035 = vmatmul.bf16.gmra.mxu0 %v497
    %v1036 = vpop.f32.mrf.mxu0
    %v1037 = vadd.f32 %v988, %v1036
    %v1038 = vpop.f32.mrf.mxu0
    %v1039 = vadd.f32 %v990, %v1038
    %1040 = vdwg.mxu0
    %1041 = vmatpush.bf16.msra.mxu0 %v813
    %1042 = vmatpush.bf16.msra.mxu0 %v812
    %1043 = vmatpush.bf16.msra.mxu0 %v811
    %1044 = vmatpush.bf16.msra.mxu0 %v810
    %1045 = vmatpush.bf16.msra.mxu0 %v809
    %1046 = vmatpush.bf16.msra.mxu0 %v808
    %1047 = vmatpush.bf16.msra.mxu0 %v807
    %1048 = vmatpush.bf16.msra.mxu0 %v806
    %1049 = vmatmul.bf16.gmra.mxu0 %v449
    %v1050 = vpop.f32.mrf.mxu0
    %v1051 = vadd.f32 %v1002, %v1050
    %v1052 = vpop.f32.mrf.mxu0
    %v1053 = vadd.f32 %v1004, %v1052
    %1054 = vmatmul.bf16.gmra.mxu0 %v456
    %v1055 = vpop.f32.mrf.mxu0
    %v1056 = vadd.f32 %v1007, %v1055
    %v1057 = vpop.f32.mrf.mxu0
    %v1058 = vadd.f32 %v1009, %v1057
    %1059 = vmatmul.bf16.gmra.mxu0 %v463
    %v1060 = vpop.f32.mrf.mxu0
    %v1061 = vadd.f32 %v1012, %v1060
    %v1062 = vpop.f32.mrf.mxu0
    %v1063 = vadd.f32 %v1014, %v1062
    %1064 = vmatmul.bf16.gmra.mxu0 %v470
    %v1065 = vpop.f32.mrf.mxu0
    %v1066 = vadd.f32 %v1017, %v1065
    %v1067 = vpop.f32.mrf.mxu0
    %v1068 = vadd.f32 %v1019, %v1067
    %1069 = vmatmul.bf16.gmra.mxu0 %v477
    %v1070 = vpop.f32.mrf.mxu0
    %v1071 = vadd.f32 %v1022, %v1070
    %v1072 = vpop.f32.mrf.mxu0
    %v1073 = vadd.f32 %v1024, %v1072
    %1074 = vmatmul.bf16.gmra.mxu0 %v484
    %v1075 = vpop.f32.mrf.mxu0
    %v1076 = vadd.f32 %v1027, %v1075
    %v1077 = vpop.f32.mrf.mxu0
    %v1078 = vadd.f32 %v1029, %v1077
    %1079 = vmatmul.bf16.gmra.mxu0 %v491
    %v1080 = vpop.f32.mrf.mxu0
    %v1081 = vadd.f32 %v1032, %v1080
    %v1082 = vpop.f32.mrf.mxu0
    %v1083 = vadd.f32 %v1034, %v1082
    %1084 = vmatmul.bf16.gmra.mxu0 %v498
    %v1085 = vpop.f32.mrf.mxu0
    %v1086 = vadd.f32 %v1037, %v1085
    %v1087 = vpop.f32.mrf.mxu0
    %v1088 = vadd.f32 %v1039, %v1087
    %1089 = vdwg.mxu0
    %1090 = vmatpush.bf16.msra.mxu0 %v821
    %1091 = vmatpush.bf16.msra.mxu0 %v820
    %1092 = vmatpush.bf16.msra.mxu0 %v819
    %1093 = vmatpush.bf16.msra.mxu0 %v818
    %1094 = vmatpush.bf16.msra.mxu0 %v817
    %1095 = vmatpush.bf16.msra.mxu0 %v816
    %1096 = vmatpush.bf16.msra.mxu0 %v815
    %1097 = vmatpush.bf16.msra.mxu0 %v814
    %1098 = vmatmul.bf16.gmra.mxu0 %v450
    %v1099 = vpop.f32.mrf.mxu0
    %v1100 = vadd.f32 %v1051, %v1099
    %v1101 = vpop.f32.mrf.mxu0
    %v1102 = vadd.f32 %v1053, %v1101
    %1103 = vmatmul.bf16.gmra.mxu0 %v457
    %v1104 = vpop.f32.mrf.mxu0
    %v1105 = vadd.f32 %v1056, %v1104
    %v1106 = vpop.f32.mrf.mxu0
    %v1107 = vadd.f32 %v1058, %v1106
    %1108 = vmatmul.bf16.gmra.mxu0 %v464
    %v1109 = vpop.f32.mrf.mxu0
    %v1110 = vadd.f32 %v1061, %v1109
    %v1111 = vpop.f32.mrf.mxu0
    %v1112 = vadd.f32 %v1063, %v1111
    %1113 = vmatmul.bf16.gmra.mxu0 %v471
    %v1114 = vpop.f32.mrf.mxu0
    %v1115 = vadd.f32 %v1066, %v1114
    %v1116 = vpop.f32.mrf.mxu0
    %v1117 = vadd.f32 %v1068, %v1116
    %1118 = vmatmul.bf16.gmra.mxu0 %v478
    %v1119 = vpop.f32.mrf.mxu0
    %v1120 = vadd.f32 %v1071, %v1119
    %v1121 = vpop.f32.mrf.mxu0
    %v1122 = vadd.f32 %v1073, %v1121
    %1123 = vmatmul.bf16.gmra.mxu0 %v485
    %v1124 = vpop.f32.mrf.mxu0
    %v1125 = vadd.f32 %v1076, %v1124
    %v1126 = vpop.f32.mrf.mxu0
    %v1127 = vadd.f32 %v1078, %v1126
    %1128 = vmatmul.bf16.gmra.mxu0 %v492
    %v1129 = vpop.f32.mrf.mxu0
    %v1130 = vadd.f32 %v1081, %v1129
    %v1131 = vpop.f32.mrf.mxu0
    %v1132 = vadd.f32 %v1083, %v1131
    %1133 = vmatmul.bf16.gmra.mxu0 %v499
    %v1134 = vpop.f32.mrf.mxu0
    %v1135 = vadd.f32 %v1086, %v1134
    %v1136 = vpop.f32.mrf.mxu0
    %v1137 = vadd.f32 %v1088, %v1136
    %1138 = vdwg.mxu0
    %1139 = vmatpush.bf16.msra.mxu0 %v829
    %1140 = vmatpush.bf16.msra.mxu0 %v828
    %1141 = vmatpush.bf16.msra.mxu0 %v827
    %1142 = vmatpush.bf16.msra.mxu0 %v826
    %1143 = vmatpush.bf16.msra.mxu0 %v825
    %1144 = vmatpush.bf16.msra.mxu0 %v824
    %1145 = vmatpush.bf16.msra.mxu0 %v823
    %1146 = vmatpush.bf16.msra.mxu0 %v822
    %1147 = vmatmul.bf16.gmra.mxu0 %v451
    %v1148 = vpop.f32.mrf.mxu0
    %v1149 = vadd.f32 %v1100, %v1148
    %v1150 = vpop.f32.mrf.mxu0
    %v1151 = vadd.f32 %v1102, %v1150
    %1152 = vmatmul.bf16.gmra.mxu0 %v458
    %v1153 = vpop.f32.mrf.mxu0
    %v1154 = vadd.f32 %v1105, %v1153
    %v1155 = vpop.f32.mrf.mxu0
    %v1156 = vadd.f32 %v1107, %v1155
    %1157 = vmatmul.bf16.gmra.mxu0 %v465
    %v1158 = vpop.f32.mrf.mxu0
    %v1159 = vadd.f32 %v1110, %v1158
    %v1160 = vpop.f32.mrf.mxu0
    %v1161 = vadd.f32 %v1112, %v1160
    %1162 = vmatmul.bf16.gmra.mxu0 %v472
    %v1163 = vpop.f32.mrf.mxu0
    %v1164 = vadd.f32 %v1115, %v1163
    %v1165 = vpop.f32.mrf.mxu0
    %v1166 = vadd.f32 %v1117, %v1165
    %1167 = vmatmul.bf16.gmra.mxu0 %v479
    %v1168 = vpop.f32.mrf.mxu0
    %v1169 = vadd.f32 %v1120, %v1168
    %v1170 = vpop.f32.mrf.mxu0
    %v1171 = vadd.f32 %v1122, %v1170
    %1172 = vmatmul.bf16.gmra.mxu0 %v486
    %v1173 = vpop.f32.mrf.mxu0
    %v1174 = vadd.f32 %v1125, %v1173
    %v1175 = vpop.f32.mrf.mxu0
    %v1176 = vadd.f32 %v1127, %v1175
    %1177 = vmatmul.bf16.gmra.mxu0 %v493
    %v1178 = vpop.f32.mrf.mxu0
    %v1179 = vadd.f32 %v1130, %v1178
    %v1180 = vpop.f32.mrf.mxu0
    %v1181 = vadd.f32 %v1132, %v1180
    %1182 = vmatmul.bf16.gmra.mxu0 %v500
    %v1183 = vpop.f32.mrf.mxu0
    %v1184 = vadd.f32 %v1135, %v1183
    %v1185 = vpop.f32.mrf.mxu0
    %v1186 = vadd.f32 %v1137, %v1185
    %1187 = vdwg.mxu0
    %1188 = vmatpush.bf16.msra.mxu0 %v837
    %1189 = vmatpush.bf16.msra.mxu0 %v836
    %1190 = vmatpush.bf16.msra.mxu0 %v835
    %1191 = vmatpush.bf16.msra.mxu0 %v834
    %1192 = vmatpush.bf16.msra.mxu0 %v833
    %1193 = vmatpush.bf16.msra.mxu0 %v832
    %1194 = vmatpush.bf16.msra.mxu0 %v831
    %1195 = vmatpush.bf16.msra.mxu0 %v830
    %1196 = vmatmul.bf16.gmra.mxu0 %v452
    %v1197 = vpop.f32.mrf.mxu0
    %v1198 = vadd.f32 %v1149, %v1197
    %v1199 = vpop.f32.mrf.mxu0
    %v1200 = vadd.f32 %v1151, %v1199
    %1201 = vmatmul.bf16.gmra.mxu0 %v459
    %v1202 = vpop.f32.mrf.mxu0
    %v1203 = vadd.f32 %v1154, %v1202
    %v1204 = vpop.f32.mrf.mxu0
    %v1205 = vadd.f32 %v1156, %v1204
    %1206 = vmatmul.bf16.gmra.mxu0 %v466
    %v1207 = vpop.f32.mrf.mxu0
    %v1208 = vadd.f32 %v1159, %v1207
    %v1209 = vpop.f32.mrf.mxu0
    %v1210 = vadd.f32 %v1161, %v1209
    %1211 = vmatmul.bf16.gmra.mxu0 %v473
    %v1212 = vpop.f32.mrf.mxu0
    %v1213 = vadd.f32 %v1164, %v1212
    %v1214 = vpop.f32.mrf.mxu0
    %v1215 = vadd.f32 %v1166, %v1214
    %1216 = vmatmul.bf16.gmra.mxu0 %v480
    %v1217 = vpop.f32.mrf.mxu0
    %v1218 = vadd.f32 %v1169, %v1217
    %v1219 = vpop.f32.mrf.mxu0
    %v1220 = vadd.f32 %v1171, %v1219
    %1221 = vmatmul.bf16.gmra.mxu0 %v487
    %v1222 = vpop.f32.mrf.mxu0
    %v1223 = vadd.f32 %v1174, %v1222
    %v1224 = vpop.f32.mrf.mxu0
    %v1225 = vadd.f32 %v1176, %v1224
    %1226 = vmatmul.bf16.gmra.mxu0 %v494
    %v1227 = vpop.f32.mrf.mxu0
    %v1228 = vadd.f32 %v1179, %v1227
    %v1229 = vpop.f32.mrf.mxu0
    %v1230 = vadd.f32 %v1181, %v1229
    %1231 = vmatmul.bf16.gmra.mxu0 %v501
    %v1232 = vpop.f32.mrf.mxu0
    %v1233 = vadd.f32 %v1184, %v1232
    %v1234 = vpop.f32.mrf.mxu0
    %v1235 = vadd.f32 %v1186, %v1234
    %1236 = vdwg.mxu0
    %v1237 = vmax.f32 %v1198, 0.0
    %v1238 = vmax.f32 %v1200, 0.0
    %v1239 = vmax.f32 %v1203, 0.0
    %v1240 = vmax.f32 %v1205, 0.0
    %v1241 = vmax.f32 %v1208, 0.0
    %v1242 = vmax.f32 %v1210, 0.0
    %v1243 = vmax.f32 %v1213, 0.0
    %v1244 = vmax.f32 %v1215, 0.0
    %v1245 = vmax.f32 %v1218, 0.0
    %v1246 = vmax.f32 %v1220, 0.0
    %v1247 = vmax.f32 %v1223, 0.0
    %v1248 = vmax.f32 %v1225, 0.0
    %v1249 = vmax.f32 %v1228, 0.0
    %v1250 = vmax.f32 %v1230, 0.0
    %v1251 = vmax.f32 %v1233, 0.0
    %v1252 = vmax.f32 %v1235, 0.0
    %v1253 = vpack.c.bf16 %v1238, %v1237
    %v1254 = vpack.c.bf16 %v1240, %v1239
    %v1255 = vpack.c.bf16 %v1242, %v1241
    %v1256 = vpack.c.bf16 %v1244, %v1243
    %v1257 = vpack.c.bf16 %v1246, %v1245
    %v1258 = vpack.c.bf16 %v1248, %v1247
    %v1259 = vpack.c.bf16 %v1250, %v1249
    %v1260 = vpack.c.bf16 %v1252, %v1251
    %v1261 = vld [vmem:[#allocation7] sm:$0xff]
    %v1262 = vld [vmem:[#allocation7 + $0x8] sm:$0xff]
    %v1263 = vld [vmem:[#allocation7 + $0x10] sm:$0xff]
    %v1264 = vld [vmem:[#allocation7 + $0x18] sm:$0xff]
    %v1265 = vld [vmem:[#allocation7 + $0x20] sm:$0xff]
    %v1266 = vld [vmem:[#allocation7 + $0x28] sm:$0xff]
    %v1267 = vld [vmem:[#allocation7 + $0x30] sm:$0xff]
    %v1268 = vld [vmem:[#allocation7 + $0x38] sm:$0xff]
    %v1269 = vld [vmem:[#allocation7 + $0x40] sm:$0xff]
    %v1270 = vld [vmem:[#allocation7 + $0x48] sm:$0xff]
    %v1271 = vld [vmem:[#allocation7 + $0x50] sm:$0xff]
    %v1272 = vld [vmem:[#allocation7 + $0x58] sm:$0xff]
    %v1273 = vld [vmem:[#allocation7 + $0x60] sm:$0xff]
    %v1274 = vld [vmem:[#allocation7 + $0x68] sm:$0xff]
    %v1275 = vld [vmem:[#allocation7 + $0x70] sm:$0xff]
    %v1276 = vld [vmem:[#allocation7 + $0x78] sm:$0xff]
    %v1277 = vld [vmem:[%s4] sm:$0x3]
    %v1279 = vperm.slane %v1277, 0
    %v1280 = vperm.slane %v1277, 1
    %v1299 = vunpack.c.l.b16 %v1261
    %v1300 = vunpack.c.h.b16 %v1261
    %v1301 = vunpack.c.l.b16 %v1262
    %v1302 = vunpack.c.h.b16 %v1262
    %v1303 = vunpack.c.l.b16 %v1263
    %v1304 = vunpack.c.h.b16 %v1263
    %v1305 = vunpack.c.l.b16 %v1264
    %v1306 = vunpack.c.h.b16 %v1264
    %v1307 = vunpack.c.l.b16 %v1265
    %v1308 = vunpack.c.h.b16 %v1265
    %v1309 = vunpack.c.l.b16 %v1266
    %v1310 = vunpack.c.h.b16 %v1266
    %v1311 = vunpack.c.l.b16 %v1267
    %v1312 = vunpack.c.h.b16 %v1267
    %v1313 = vunpack.c.l.b16 %v1268
    %v1314 = vunpack.c.h.b16 %v1268
    %v1315 = vunpack.c.l.b16 %v1269
    %v1316 = vunpack.c.h.b16 %v1269
    %v1317 = vunpack.c.l.b16 %v1270
    %v1318 = vunpack.c.h.b16 %v1270
    %v1319 = vunpack.c.l.b16 %v1271
    %v1320 = vunpack.c.h.b16 %v1271
    %v1321 = vunpack.c.l.b16 %v1272
    %v1322 = vunpack.c.h.b16 %v1272
    %v1323 = vunpack.c.l.b16 %v1273
    %v1324 = vunpack.c.h.b16 %v1273
    %v1325 = vunpack.c.l.b16 %v1274
    %v1326 = vunpack.c.h.b16 %v1274
    %v1327 = vunpack.c.l.b16 %v1275
    %v1328 = vunpack.c.h.b16 %v1275
    %v1329 = vunpack.c.l.b16 %v1276
    %v1330 = vunpack.c.h.b16 %v1276
    %v1331 = vpack.c.b16 %v1301, %v1299
    %v1332 = vpack.c.b16 %v1302, %v1300
    %v1333 = vpack.c.b16 %v1305, %v1303
    %v1334 = vpack.c.b16 %v1306, %v1304
    %v1335 = vpack.c.b16 %v1309, %v1307
    %v1336 = vpack.c.b16 %v1310, %v1308
    %v1337 = vpack.c.b16 %v1313, %v1311
    %v1338 = vpack.c.b16 %v1314, %v1312
    %v1339 = vpack.c.b16 %v1317, %v1315
    %v1340 = vpack.c.b16 %v1318, %v1316
    %v1341 = vpack.c.b16 %v1321, %v1319
    %v1342 = vpack.c.b16 %v1322, %v1320
    %v1343 = vpack.c.b16 %v1325, %v1323
    %v1344 = vpack.c.b16 %v1326, %v1324
    %v1345 = vpack.c.b16 %v1329, %v1327
    %v1346 = vpack.c.b16 %v1330, %v1328
    %1363 = vmatpush.bf16.msra.mxu0 %v1345
    %1364 = vmatpush.bf16.msra.mxu0 %v1343
    %1365 = vmatpush.bf16.msra.mxu0 %v1341
    %1366 = vmatpush.bf16.msra.mxu0 %v1339
    %1367 = vmatpush.bf16.msra.mxu0 %v1337
    %1368 = vmatpush.bf16.msra.mxu0 %v1335
    %1369 = vmatpush.bf16.msra.mxu0 %v1333
    %1370 = vmatpush.bf16.msra.mxu0 %v1331
    %1371 = vmatmul.bf16.gmra.mxu0 %v1253
    %v1372 = vpop.f32.mrf.mxu0
    %v1373 = vadd.f32 %v1279, %v1372
    %v1374 = vpop.f32.mrf.mxu0
    %v1375 = vadd.f32 %v1279, %v1374
    %1376 = vmatmul.bf16.gmra.mxu0 %v1254
    %v1377 = vpop.f32.mrf.mxu0
    %v1378 = vadd.f32 %v1279, %v1377
    %v1379 = vpop.f32.mrf.mxu0
    %v1380 = vadd.f32 %v1279, %v1379
    %1381 = vmatmul.bf16.gmra.mxu0 %v1255
    %v1382 = vpop.f32.mrf.mxu0
    %v1383 = vadd.f32 %v1279, %v1382
    %v1384 = vpop.f32.mrf.mxu0
    %v1385 = vadd.f32 %v1279, %v1384
    %1386 = vmatmul.bf16.gmra.mxu0 %v1256
    %v1387 = vpop.f32.mrf.mxu0
    %v1388 = vadd.f32 %v1279, %v1387
    %v1389 = vpop.f32.mrf.mxu0
    %v1390 = vadd.f32 %v1279, %v1389
    %1391 = vmatmul.bf16.gmra.mxu0 %v1257
    %v1392 = vpop.f32.mrf.mxu0
    %v1393 = vadd.f32 %v1279, %v1392
    %v1394 = vpop.f32.mrf.mxu0
    %v1395 = vadd.f32 %v1279, %v1394
    %1396 = vmatmul.bf16.gmra.mxu0 %v1258
    %v1397 = vpop.f32.mrf.mxu0
    %v1398 = vadd.f32 %v1279, %v1397
    %v1399 = vpop.f32.mrf.mxu0
    %v1400 = vadd.f32 %v1279, %v1399
    %1401 = vmatmul.bf16.gmra.mxu0 %v1259
    %v1402 = vpop.f32.mrf.mxu0
    %v1403 = vadd.f32 %v1279, %v1402
    %v1404 = vpop.f32.mrf.mxu0
    %v1405 = vadd.f32 %v1279, %v1404
    %1406 = vmatmul.bf16.gmra.mxu0 %v1260
    %v1407 = vpop.f32.mrf.mxu0
    %v1408 = vadd.f32 %v1279, %v1407
    %v1409 = vpop.f32.mrf.mxu0
    %v1410 = vadd.f32 %v1279, %v1409
    %1411 = vdwg.mxu0
    %1412 = vmatpush.bf16.msra.mxu0 %v1346
    %1413 = vmatpush.bf16.msra.mxu0 %v1344
    %1414 = vmatpush.bf16.msra.mxu0 %v1342
    %1415 = vmatpush.bf16.msra.mxu0 %v1340
    %1416 = vmatpush.bf16.msra.mxu0 %v1338
    %1417 = vmatpush.bf16.msra.mxu0 %v1336
    %1418 = vmatpush.bf16.msra.mxu0 %v1334
    %1419 = vmatpush.bf16.msra.mxu0 %v1332
    %1420 = vmatmul.bf16.gmra.mxu0 %v1253
    %v1421 = vpop.f32.mrf.mxu0
    %v1422 = vadd.f32 %v1280, %v1421
    %v1423 = vpop.f32.mrf.mxu0
    %v1424 = vadd.f32 %v1280, %v1423
    %1425 = vmatmul.bf16.gmra.mxu0 %v1254
    %v1426 = vpop.f32.mrf.mxu0
    %v1427 = vadd.f32 %v1280, %v1426
    %v1428 = vpop.f32.mrf.mxu0
    %v1429 = vadd.f32 %v1280, %v1428
    %1430 = vmatmul.bf16.gmra.mxu0 %v1255
    %v1431 = vpop.f32.mrf.mxu0
    %v1432 = vadd.f32 %v1280, %v1431
    %v1433 = vpop.f32.mrf.mxu0
    %v1434 = vadd.f32 %v1280, %v1433
    %1435 = vmatmul.bf16.gmra.mxu0 %v1256
    %v1436 = vpop.f32.mrf.mxu0
    %v1437 = vadd.f32 %v1280, %v1436
    %v1438 = vpop.f32.mrf.mxu0
    %v1439 = vadd.f32 %v1280, %v1438
    %1440 = vmatmul.bf16.gmra.mxu0 %v1257
    %v1441 = vpop.f32.mrf.mxu0
    %v1442 = vadd.f32 %v1280, %v1441
    %v1443 = vpop.f32.mrf.mxu0
    %v1444 = vadd.f32 %v1280, %v1443
    %1445 = vmatmul.bf16.gmra.mxu0 %v1258
    %v1446 = vpop.f32.mrf.mxu0
    %v1447 = vadd.f32 %v1280, %v1446
    %v1448 = vpop.f32.mrf.mxu0
    %v1449 = vadd.f32 %v1280, %v1448
    %1450 = vmatmul.bf16.gmra.mxu0 %v1259
    %v1451 = vpop.f32.mrf.mxu0
    %v1452 = vadd.f32 %v1280, %v1451
    %v1453 = vpop.f32.mrf.mxu0
    %v1454 = vadd.f32 %v1280, %v1453
    %1455 = vmatmul.bf16.gmra.mxu0 %v1260
    %v1456 = vpop.f32.mrf.mxu0
    %v1457 = vadd.f32 %v1280, %v1456
    %v1458 = vpop.f32.mrf.mxu0
    %v1459 = vadd.f32 %v1280, %v1458
    %1460 = vdwg.mxu0
    %v1461 = vmax.f32 %v1373, 0.0
    %v1462 = vmax.f32 %v1422, 0.0
    %v1463 = vmax.f32 %v1375, 0.0
    %v1464 = vmax.f32 %v1424, 0.0
    %v1465 = vmax.f32 %v1378, 0.0
    %v1466 = vmax.f32 %v1427, 0.0
    %v1467 = vmax.f32 %v1380, 0.0
    %v1468 = vmax.f32 %v1429, 0.0
    %v1469 = vmax.f32 %v1383, 0.0
    %v1470 = vmax.f32 %v1432, 0.0
    %v1471 = vmax.f32 %v1385, 0.0
    %v1472 = vmax.f32 %v1434, 0.0
    %v1473 = vmax.f32 %v1388, 0.0
    %v1474 = vmax.f32 %v1437, 0.0
    %v1475 = vmax.f32 %v1390, 0.0
    %v1476 = vmax.f32 %v1439, 0.0
    %v1477 = vmax.f32 %v1393, 0.0
    %v1478 = vmax.f32 %v1442, 0.0
    %v1479 = vmax.f32 %v1395, 0.0
    %v1480 = vmax.f32 %v1444, 0.0
    %v1481 = vmax.f32 %v1398, 0.0
    %v1482 = vmax.f32 %v1447, 0.0
    %v1483 = vmax.f32 %v1400, 0.0
    %v1484 = vmax.f32 %v1449, 0.0
    %v1485 = vmax.f32 %v1403, 0.0
    %v1486 = vmax.f32 %v1452, 0.0
    %v1487 = vmax.f32 %v1405, 0.0
    %v1488 = vmax.f32 %v1454, 0.0
    %v1489 = vmax.f32 %v1408, 0.0
    %v1490 = vmax.f32 %v1457, 0.0
    %v1491 = vmax.f32 %v1410, 0.0
    %v1492 = vmax.f32 %v1459, 0.0
    %v1493 = vpack.c.bf16 %v1463, %v1461
    %v1494 = vpack.c.bf16 %v1464, %v1462
    %v1495 = vpack.c.bf16 %v1467, %v1465
    %v1496 = vpack.c.bf16 %v1468, %v1466
    %v1497 = vpack.c.bf16 %v1471, %v1469
    %v1498 = vpack.c.bf16 %v1472, %v1470
    %v1499 = vpack.c.bf16 %v1475, %v1473
    %v1500 = vpack.c.bf16 %v1476, %v1474
    %v1501 = vpack.c.bf16 %v1479, %v1477
    %v1502 = vpack.c.bf16 %v1480, %v1478
    %v1503 = vpack.c.bf16 %v1483, %v1481
    %v1504 = vpack.c.bf16 %v1484, %v1482
    %v1505 = vpack.c.bf16 %v1487, %v1485
    %v1506 = vpack.c.bf16 %v1488, %v1486
    %v1507 = vpack.c.bf16 %v1491, %v1489
    %v1508 = vpack.c.bf16 %v1492, %v1490
    %v1509 = vld [vmem:[#allocation8] sm:$0xf]
    %v1510 = vld [vmem:[#allocation8 + $0x4] sm:$0xf]
    %v1511 = vld [vmem:[#allocation8 + $0x8] sm:$0xf]
    %v1512 = vld [vmem:[#allocation8 + $0xc] sm:$0xf]
    %v1513 = vld [vmem:[#allocation8 + $0x10] sm:$0xf]
    %v1514 = vld [vmem:[#allocation8 + $0x14] sm:$0xf]
    %v1515 = vld [vmem:[#allocation8 + $0x18] sm:$0xf]
    %v1516 = vld [vmem:[#allocation8 + $0x1c] sm:$0xf]
    %v1517 = vld [vmem:[#allocation8 + $0x20] sm:$0xf]
    %v1518 = vld [vmem:[#allocation8 + $0x24] sm:$0xf]
    %v1519 = vld [vmem:[#allocation8 + $0x28] sm:$0xf]
    %v1520 = vld [vmem:[#allocation8 + $0x2c] sm:$0xf]
    %v1521 = vld [vmem:[#allocation8 + $0x30] sm:$0xf]
    %v1522 = vld [vmem:[#allocation8 + $0x34] sm:$0xf]
    %v1523 = vld [vmem:[#allocation8 + $0x38] sm:$0xf]
    %v1524 = vld [vmem:[#allocation8 + $0x3c] sm:$0xf]
    %v1525 = vld [vmem:[#allocation8 + $0x40] sm:$0xf]
    %v1526 = vld [vmem:[#allocation8 + $0x44] sm:$0xf]
    %v1527 = vld [vmem:[#allocation8 + $0x48] sm:$0xf]
    %v1528 = vld [vmem:[#allocation8 + $0x4c] sm:$0xf]
    %v1529 = vld [vmem:[#allocation8 + $0x50] sm:$0xf]
    %v1530 = vld [vmem:[#allocation8 + $0x54] sm:$0xf]
    %v1531 = vld [vmem:[#allocation8 + $0x58] sm:$0xf]
    %v1532 = vld [vmem:[#allocation8 + $0x5c] sm:$0xf]
    %v1533 = vld [vmem:[#allocation8 + $0x60] sm:$0xf]
    %v1534 = vld [vmem:[#allocation8 + $0x64] sm:$0xf]
    %v1535 = vld [vmem:[#allocation8 + $0x68] sm:$0xf]
    %v1536 = vld [vmem:[#allocation8 + $0x6c] sm:$0xf]
    %v1537 = vld [vmem:[#allocation8 + $0x70] sm:$0xf]
    %v1538 = vld [vmem:[#allocation8 + $0x74] sm:$0xf]
    %v1539 = vld [vmem:[#allocation8 + $0x78] sm:$0xf]
    %v1540 = vld [vmem:[#allocation8 + $0x7c] sm:$0xf]
    %v1541 = vld [vmem:[%s6] sm:$0x1]
    %v1543 = vperm.slane %v1541, 0
    %v1577 = vunpack.c.l.b16 %v1509
    %v1578 = vunpack.c.l.b16 %v1510
    %v1579 = vunpack.c.l.b16 %v1511
    %v1580 = vunpack.c.l.b16 %v1512
    %v1581 = vunpack.c.l.b16 %v1513
    %v1582 = vunpack.c.l.b16 %v1514
    %v1583 = vunpack.c.l.b16 %v1515
    %v1584 = vunpack.c.l.b16 %v1516
    %v1585 = vunpack.c.l.b16 %v1517
    %v1586 = vunpack.c.l.b16 %v1518
    %v1587 = vunpack.c.l.b16 %v1519
    %v1588 = vunpack.c.l.b16 %v1520
    %v1589 = vunpack.c.l.b16 %v1521
    %v1590 = vunpack.c.l.b16 %v1522
    %v1591 = vunpack.c.l.b16 %v1523
    %v1592 = vunpack.c.l.b16 %v1524
    %v1593 = vunpack.c.l.b16 %v1525
    %v1594 = vunpack.c.l.b16 %v1526
    %v1595 = vunpack.c.l.b16 %v1527
    %v1596 = vunpack.c.l.b16 %v1528
    %v1597 = vunpack.c.l.b16 %v1529
    %v1598 = vunpack.c.l.b16 %v1530
    %v1599 = vunpack.c.l.b16 %v1531
    %v1600 = vunpack.c.l.b16 %v1532
    %v1601 = vunpack.c.l.b16 %v1533
    %v1602 = vunpack.c.l.b16 %v1534
    %v1603 = vunpack.c.l.b16 %v1535
    %v1604 = vunpack.c.l.b16 %v1536
    %v1605 = vunpack.c.l.b16 %v1537
    %v1606 = vunpack.c.l.b16 %v1538
    %v1607 = vunpack.c.l.b16 %v1539
    %v1608 = vunpack.c.l.b16 %v1540
    %v1609 = vpack.c.b16 %v1578, %v1577
    %v1610 = vpack.c.b16 %v1580, %v1579
    %v1611 = vpack.c.b16 %v1582, %v1581
    %v1612 = vpack.c.b16 %v1584, %v1583
    %v1613 = vpack.c.b16 %v1586, %v1585
    %v1614 = vpack.c.b16 %v1588, %v1587
    %v1615 = vpack.c.b16 %v1590, %v1589
    %v1616 = vpack.c.b16 %v1592, %v1591
    %v1617 = vpack.c.b16 %v1594, %v1593
    %v1618 = vpack.c.b16 %v1596, %v1595
    %v1619 = vpack.c.b16 %v1598, %v1597
    %v1620 = vpack.c.b16 %v1600, %v1599
    %v1621 = vpack.c.b16 %v1602, %v1601
    %v1622 = vpack.c.b16 %v1604, %v1603
    %v1623 = vpack.c.b16 %v1606, %v1605
    %v1624 = vpack.c.b16 %v1608, %v1607
    %1641 = vmatpush.bf16.msra.mxu0 %v1616
    %1642 = vmatpush.bf16.msra.mxu0 %v1615
    %1643 = vmatpush.bf16.msra.mxu0 %v1614
    %1644 = vmatpush.bf16.msra.mxu0 %v1613
    %1645 = vmatpush.bf16.msra.mxu0 %v1612
    %1646 = vmatpush.bf16.msra.mxu0 %v1611
    %1647 = vmatpush.bf16.msra.mxu0 %v1610
    %1648 = vmatpush.bf16.msra.mxu0 %v1609
    %1649 = vmatmul.bf16.gmra.mxu0 %v1493
    %v1650 = vpop.f32.mrf.mxu0
    %v1651 = vadd.f32 %v1543, %v1650
    %v1652 = vpop.f32.mrf.mxu0
    %v1653 = vadd.f32 %v1543, %v1652
    %1654 = vmatmul.bf16.gmra.mxu0 %v1495
    %v1655 = vpop.f32.mrf.mxu0
    %v1656 = vadd.f32 %v1543, %v1655
    %v1657 = vpop.f32.mrf.mxu0
    %v1658 = vadd.f32 %v1543, %v1657
    %1659 = vmatmul.bf16.gmra.mxu0 %v1497
    %v1660 = vpop.f32.mrf.mxu0
    %v1661 = vadd.f32 %v1543, %v1660
    %v1662 = vpop.f32.mrf.mxu0
    %v1663 = vadd.f32 %v1543, %v1662
    %1664 = vmatmul.bf16.gmra.mxu0 %v1499
    %v1665 = vpop.f32.mrf.mxu0
    %v1666 = vadd.f32 %v1543, %v1665
    %v1667 = vpop.f32.mrf.mxu0
    %v1668 = vadd.f32 %v1543, %v1667
    %1669 = vmatmul.bf16.gmra.mxu0 %v1501
    %v1670 = vpop.f32.mrf.mxu0
    %v1671 = vadd.f32 %v1543, %v1670
    %v1672 = vpop.f32.mrf.mxu0
    %v1673 = vadd.f32 %v1543, %v1672
    %1674 = vmatmul.bf16.gmra.mxu0 %v1503
    %v1675 = vpop.f32.mrf.mxu0
    %v1676 = vadd.f32 %v1543, %v1675
    %v1677 = vpop.f32.mrf.mxu0
    %v1678 = vadd.f32 %v1543, %v1677
    %1679 = vmatmul.bf16.gmra.mxu0 %v1505
    %v1680 = vpop.f32.mrf.mxu0
    %v1681 = vadd.f32 %v1543, %v1680
    %v1682 = vpop.f32.mrf.mxu0
    %v1683 = vadd.f32 %v1543, %v1682
    %1684 = vmatmul.bf16.gmra.mxu0 %v1507
    %v1685 = vpop.f32.mrf.mxu0
    %v1686 = vadd.f32 %v1543, %v1685
    %v1687 = vpop.f32.mrf.mxu0
    %v1688 = vadd.f32 %v1543, %v1687
    %1689 = vdwg.mxu0
    %1690 = vmatpush.bf16.msra.mxu0 %v1624
    %1691 = vmatpush.bf16.msra.mxu0 %v1623
    %1692 = vmatpush.bf16.msra.mxu0 %v1622
    %1693 = vmatpush.bf16.msra.mxu0 %v1621
    %1694 = vmatpush.bf16.msra.mxu0 %v1620
    %1695 = vmatpush.bf16.msra.mxu0 %v1619
    %1696 = vmatpush.bf16.msra.mxu0 %v1618
    %1697 = vmatpush.bf16.msra.mxu0 %v1617
    %1698 = vmatmul.bf16.gmra.mxu0 %v1494
    %v1699 = vpop.f32.mrf.mxu0
    %v1700 = vadd.f32 %v1651, %v1699
    %v1701 = vpop.f32.mrf.mxu0
    %v1702 = vadd.f32 %v1653, %v1701
    %1703 = vmatmul.bf16.gmra.mxu0 %v1496
    %v1704 = vpop.f32.mrf.mxu0
    %v1705 = vadd.f32 %v1656, %v1704
    %v1706 = vpop.f32.mrf.mxu0
    %v1707 = vadd.f32 %v1658, %v1706
    %1708 = vmatmul.bf16.gmra.mxu0 %v1498
    %v1709 = vpop.f32.mrf.mxu0
    %v1710 = vadd.f32 %v1661, %v1709
    %v1711 = vpop.f32.mrf.mxu0
    %v1712 = vadd.f32 %v1663, %v1711
    %1713 = vmatmul.bf16.gmra.mxu0 %v1500
    %v1714 = vpop.f32.mrf.mxu0
    %v1715 = vadd.f32 %v1666, %v1714
    %v1716 = vpop.f32.mrf.mxu0
    %v1717 = vadd.f32 %v1668, %v1716
    %1718 = vmatmul.bf16.gmra.mxu0 %v1502
    %v1719 = vpop.f32.mrf.mxu0
    %v1720 = vadd.f32 %v1671, %v1719
    %v1721 = vpop.f32.mrf.mxu0
    %v1722 = vadd.f32 %v1673, %v1721
    %1723 = vmatmul.bf16.gmra.mxu0 %v1504
    %v1724 = vpop.f32.mrf.mxu0
    %v1725 = vadd.f32 %v1676, %v1724
    %v1726 = vpop.f32.mrf.mxu0
    %v1727 = vadd.f32 %v1678, %v1726
    %1728 = vmatmul.bf16.gmra.mxu0 %v1506
    %v1729 = vpop.f32.mrf.mxu0
    %v1730 = vadd.f32 %v1681, %v1729
    %v1731 = vpop.f32.mrf.mxu0
    %v1732 = vadd.f32 %v1683, %v1731
    %1733 = vmatmul.bf16.gmra.mxu0 %v1508
    %v1734 = vpop.f32.mrf.mxu0
    %v1735 = vadd.f32 %v1686, %v1734
    %v1736 = vpop.f32.mrf.mxu0
    %v1737 = vadd.f32 %v1688, %v1736
    %1738 = vdwg.mxu0
    %1739 = vst [vmem:[#allocation10] sm:$0xff] %v1700
    %1740 = vst [vmem:[#allocation10 + $0x8] sm:$0xff] %v1702
    %1741 = vst [vmem:[#allocation10 + $0x10] sm:$0xff] %v1705
    %1742 = vst [vmem:[#allocation10 + $0x18] sm:$0xff] %v1707
    %1743 = vst [vmem:[#allocation10 + $0x20] sm:$0xff] %v1710
    %1744 = vst [vmem:[#allocation10 + $0x28] sm:$0xff] %v1712
    %1745 = vst [vmem:[#allocation10 + $0x30] sm:$0xff] %v1715
    %1746 = vst [vmem:[#allocation10 + $0x38] sm:$0xff] %v1717
    %1747 = vst [vmem:[#allocation10 + $0x40] sm:$0xff] %v1720
    %1748 = vst [vmem:[#allocation10 + $0x48] sm:$0xff] %v1722
    %1749 = vst [vmem:[#allocation10 + $0x50] sm:$0xff] %v1725
    %1750 = vst [vmem:[#allocation10 + $0x58] sm:$0xff] %v1727
    %1751 = vst [vmem:[#allocation10 + $0x60] sm:$0xff] %v1730
    %1752 = vst [vmem:[#allocation10 + $0x68] sm:$0xff] %v1732
    %1753 = vst [vmem:[#allocation10 + $0x70] sm:$0xff] %v1735
    %1754 = vst [vmem:[#allocation10 + $0x78] sm:$0xff] %v1737
    // Predicated region
    $region46: #{tpu_custom_call.1} parent=1 // pred_check
      _
    $region47: #{tpu_custom_call.1} parent=1 // pred_check_branch
      %1756 = sbr.rel (0) target = $region49
    $region48: #{tpu_custom_call.1} parent=1 // pred_region
      %1758 = vsyncadd [#allocation4], 0
      %s1759 = sshll.u32 [#allocation10], 4
      %s1760 = int_to_ptr.vmem [resolvable:$true] %s1759
      %s1761 = sshll.u32 %s7, 4
      %s1762 = int_to_ptr.hbm [resolvable:$true] %s1761
      %1767 = dma.vmem_to_hbm [thread:$0]  %s1760, 2048, %s1762, [#allocation4], 128, 128, 8
    $region49: #{tpu_custom_call.1} parent=1 // pred_fallthru
      _
    // Predicated region
    $region50: #{tpu_custom_call.1} parent=1 // pred_check
      _
    $region51: #{tpu_custom_call.1} parent=1 // pred_check_branch
      %1769 = sbr.rel (0) target = $region53
    $region52: #{tpu_custom_call.1} parent=1 // pred_region
      %1771 = dma.done [#allocation4], 2048
    $region53: #{tpu_custom_call.1} parent=1 // pred_fallthru
      _
    %1772 = vsyncpa [#allocation3], 1
    %1773 = vsyncpa [#allocation6], 1
    %1774 = vsyncpa [#allocation9], 1
    %1775 = vsyncpa [#allocation4], 1

</llo_original>
